<compile_context>
chip_gen: v6e
topology: v6e:2x2x1
jax: 0.10.0
libtpu: 0.0.40
codegen_flags: <defaults>
</compile_context>

<pallas_src>
import functools

import jax
import jax.numpy as jnp
from jax.experimental import pallas as pl
from jax.experimental.pallas import tpu as pltpu

# ----------------------------- configuration (small shapes) -----------------------------
VOCAB_SIZE = 64
EMBED_DIM = 128          # embedding_dim == in_channel
OUT_CHANNEL = 128        # num_filters == FFN input_dim
MID_DIM = OUT_CHANNEL // 2
NUM_CLASSES = 3
KERNEL_SIZES = (1, 3, 5)
MAX_PAD = max(k // 2 for k in KERNEL_SIZES)      # = 2
NUM_SHIFTS = 2 * MAX_PAD + 1                     # = 5 distinct shifted views of the sequence
NUM_BRANCHES = len(KERNEL_SIZES)
BATCH = 2
SEQ_LEN = 8
LEAKY_SLOPE = 0.01       # nn.LeakyReLU() default negative_slope


# ----------------------------------- Pallas kernel --------------------------------------
def dummy_model_kernel(ids_ref,                   # (B*L, 1)  int32 token ids
                       emb_ref,                   # (V, C)    bf16 embedding table
                       wbig_ref,                  # (5*C, 3*C) bf16 fused conv weight
                       bbig_ref,                  # (1, 3*C)  f32 fused conv bias
                       wf1_ref, bf1_ref,          # (C, MID) bf16, (1, MID) f32
                       wf2_ref, bf2_ref,          # (MID, NCLS) bf16, (1, NCLS) f32
                       logits_ref,                # out: (B, NCLS) f32
                       probs_ref,                 # out: (B, 1)    f32
                       preds_ref,                 # out: (B, 1)    i32
                       xbig_ref,                  # scratch: (B*L, 5*C) f32
                       *, batch, seq_len):
    B, L = batch, seq_len
    V, C = emb_ref.shape                          # vocab, in_channel
    CO = wf1_ref.shape[0]                         # out_channel (== C here)

    # ---- embedding gather fused in-kernel: one-hot(ids) @ table (single MXU push) ----
    ids = ids_ref[...]                                                  # (B*L, 1) int32
    onehot = (jax.lax.broadcasted_iota(jnp.int32, (B * L, V), 1) == ids)
    gathered = jnp.dot(onehot.astype(jnp.bfloat16), emb_ref[...],
                       preferred_element_type=jnp.float32)              # (B*L, C) f32

    # ---- build X_big = [x(t+0) | x(t+1) | ... | x(t+4)] with zero padding -------------
    xbig_ref[...] = jnp.zeros_like(xbig_ref)
    for b in range(B):                            # B, NUM_SHIFTS tiny & static -> unrolled
        base = b * L
        for s in range(NUM_SHIFTS):
            d = s - MAX_PAD                       # shift relative to the output position
            lo = max(0, -d)
            hi = min(L, L - d)
            xbig_ref[base + lo: base + hi, s * C:(s + 1) * C] = \
                gathered[base + lo + d: base + hi + d, :]

    # ---- every conv tap / branch / batch row in ONE (B*L,5C) x (5C,3C) matmul ---------
    conv = jnp.dot(xbig_ref[...].astype(jnp.bfloat16), wbig_ref[...],
                   preferred_element_type=jnp.float32)                  # (B*L, 3*CO)
    conv = jnp.maximum(conv + bbig_ref[...], 0.0)                       # bias + ReLU
    pooled_all = jnp.max(conv.reshape(B, L, NUM_BRANCHES * CO), axis=1)  # (B, 3*CO)
    hidden = pooled_all[:, 0:CO]                                        # sum the 3 branches
    for i in range(1, NUM_BRANCHES):
        hidden = hidden + pooled_all[:, i * CO:(i + 1) * CO]            # (B, CO)

    # ---- FFN (batched over B): LeakyReLU(h @ W1 + b1) @ W2 + b2 -----------------------
    z = jnp.dot(hidden.astype(jnp.bfloat16), wf1_ref[...],
                preferred_element_type=jnp.float32) + bf1_ref[...]
    z = jnp.where(z > 0, z, LEAKY_SLOPE * z)                            # LeakyReLU
    logits = jnp.dot(z.astype(jnp.bfloat16), wf2_ref[...],
                     preferred_element_type=jnp.float32) + bf2_ref[...]  # (B, NCLS)

    # ---- softmax(-1).max(-1) -> (probs, preds) ----------------------------------------
    m = jnp.max(logits, axis=-1, keepdims=True)
    e = jnp.exp(logits - m)
    p = e * pl.reciprocal(jnp.sum(e, axis=-1, keepdims=True), approx=True)
    probs = jnp.max(p, axis=-1, keepdims=True)                          # (B, 1)
    cls_idx = jax.lax.broadcasted_iota(jnp.int32, p.shape, 1)
    preds = jnp.min(jnp.where(p >= probs, cls_idx, p.shape[1]),         # first max (torch-style)
                    axis=-1, keepdims=True).astype(jnp.int32)           # (B, 1)

    logits_ref[...] = logits
    probs_ref[...] = probs
    preds_ref[...] = preds


# ------------------------------------- wrapper -------------------------------------------
def init_params(key):
    """Mirror of the PyTorch parameters (f32, per-branch), before kernel packing."""
    ks = jax.random.split(key, 12)
    return {
        "embedding": jax.random.normal(ks[0], (VOCAB_SIZE, EMBED_DIM), jnp.float32) * 0.1,
        # conv weights stored (k, C_in, C_out); biases stored (1, C_out)
        "w1": jax.random.normal(ks[1], (1, EMBED_DIM, OUT_CHANNEL), jnp.float32) * 0.05,
        "b1": jax.random.normal(ks[2], (1, OUT_CHANNEL), jnp.float32) * 0.01,
        "w3": jax.random.normal(ks[3], (3, EMBED_DIM, OUT_CHANNEL), jnp.float32) * 0.05,
        "b3": jax.random.normal(ks[4], (1, OUT_CHANNEL), jnp.float32) * 0.01,
        "w5": jax.random.normal(ks[5], (5, EMBED_DIM, OUT_CHANNEL), jnp.float32) * 0.05,
        "b5": jax.random.normal(ks[6], (1, OUT_CHANNEL), jnp.float32) * 0.01,
        # FFN weights stored (in, out)
        "wf1": jax.random.normal(ks[7], (OUT_CHANNEL, MID_DIM), jnp.float32) * 0.05,
        "bf1": jax.random.normal(ks[8], (1, MID_DIM), jnp.float32) * 0.01,
        "wf2": jax.random.normal(ks[9], (MID_DIM, NUM_CLASSES), jnp.float32) * 0.05,
        "bf2": jax.random.normal(ks[10], (1, NUM_CLASSES), jnp.float32) * 0.01,
    }


def pack_params(params):
    """One-time packing: block-structured W_big + fused bias + bf16 matmul operands."""
    C = EMBED_DIM
    wbig = jnp.zeros((NUM_SHIFTS * C, NUM_BRANCHES * OUT_CHANNEL), jnp.float32)
    for branch, k in enumerate(KERNEL_SIZES):
        w = params[f"w{k}"]                       # (k, C_in, C_out)
        pad = k // 2
        for t in range(k):
            s = MAX_PAD - pad + t                 # which shifted view this tap reads
            wbig = wbig.at[s * C:(s + 1) * C,
                           branch * OUT_CHANNEL:(branch + 1) * OUT_CHANNEL].set(w[t])
    bbig = jnp.concatenate([params["b1"], params["b3"], params["b5"]], axis=-1)
    return {
        "emb":  params["embedding"].astype(jnp.bfloat16),
        "wbig": wbig.astype(jnp.bfloat16),
        "bbig": bbig.astype(jnp.float32),
        "wf1":  params["wf1"].astype(jnp.bfloat16),
        "bf1":  params["bf1"].astype(jnp.float32),
        "wf2":  params["wf2"].astype(jnp.bfloat16),
        "bf2":  params["bf2"].astype(jnp.float32),
    }


@jax.jit
def dummy_model_forward(packed, input_ids, labels=None):
    B, L = input_ids.shape
    ids2d = input_ids.reshape(B * L, 1).astype(jnp.int32)

    kernel = functools.partial(dummy_model_kernel, batch=B, seq_len=L)
    vmem = pltpu.MemorySpace.VMEM
    logits, probs, preds = pl.pallas_call(
        kernel,
        out_shape=(
            jax.ShapeDtypeStruct((B, NUM_CLASSES), jnp.float32),
            jax.ShapeDtypeStruct((B, 1), jnp.float32),
            jax.ShapeDtypeStruct((B, 1), jnp.int32),
        ),
        in_specs=[pl.BlockSpec(memory_space=vmem)] * 8,
        out_specs=(pl.BlockSpec(memory_space=vmem),) * 3,
        scratch_shapes=[pltpu.VMEM((B * L, NUM_SHIFTS * EMBED_DIM), jnp.float32)],
    )(ids2d, packed["emb"], packed["wbig"], packed["bbig"],
      packed["wf1"], packed["bf1"], packed["wf2"], packed["bf2"])

    results = {
        "logits": logits,                 # (B, NUM_CLASSES)
        "probs": probs[:, 0],             # (B,)
        "preds": preds[:, 0],             # (B,) int32 (torch returns int64 indices)
    }
    if labels is not None:
        # nn.CrossEntropyLoss (mean reduction) — scalar glue outside the kernel.
        logp = jax.nn.log_softmax(logits, axis=-1)
        nll = -jnp.take_along_axis(logp, labels[:, None].astype(jnp.int32), axis=-1)[:, 0]
        results["loss"] = jnp.mean(nll)
    return results


# --------------------------------------- main --------------------------------------------
if __name__ == "__main__":
    key = jax.random.PRNGKey(0)
    pkey, ikey, lkey = jax.random.split(key, 3)

    params = init_params(pkey)
    packed = pack_params(params)          # one-time weight packing (outside the hot path)
    input_ids = jax.random.randint(ikey, (BATCH, SEQ_LEN), 0, VOCAB_SIZE, dtype=jnp.int32)
    labels = jax.random.randint(lkey, (BATCH,), 0, NUM_CLASSES, dtype=jnp.int32)

    out = dummy_model_forward(packed, input_ids, labels)
    jax.block_until_ready(out)

    assert out["logits"].shape == (BATCH, NUM_CLASSES)
    assert out["probs"].shape == (BATCH,)
    assert out["preds"].shape == (BATCH,)
    assert out["loss"].shape == ()
    print("KERNEL_OK")
</pallas_src>

<mosaic_0001>
module attributes {stable_mosaic.version = 11 : i64} {
  func.func @dummy_model_kernel(%arg0: memref<16x1xi32, #tpu.memory_space<vmem>>, %arg1: memref<64x128xbf16, #tpu.memory_space<vmem>>, %arg2: memref<640x384xbf16, #tpu.memory_space<vmem>>, %arg3: memref<1x384xf32, #tpu.memory_space<vmem>>, %arg4: memref<128x64xbf16, #tpu.memory_space<vmem>>, %arg5: memref<1x64xf32, #tpu.memory_space<vmem>>, %arg6: memref<64x3xbf16, #tpu.memory_space<vmem>>, %arg7: memref<1x3xf32, #tpu.memory_space<vmem>>, %arg8: memref<2x3xf32, #tpu.memory_space<vmem>>, %arg9: memref<2x1xf32, #tpu.memory_space<vmem>>, %arg10: memref<2x1xi32, #tpu.memory_space<vmem>>, %arg11: memref<16x640xf32, #tpu.memory_space<vmem>>) attributes {dimension_semantics = [], scalar_prefetch = 0 : i64, scratch_operands = 1 : i64, tpu.core_type = #tpu.core_type<tc>} {
    %c0 = arith.constant 0 : index
    %c0_0 = arith.constant 0 : index
    %0 = vector.load %arg0[%c0, %c0_0] : memref<16x1xi32, #tpu.memory_space<vmem>>, vector<16x1xi32>
    %1 = tpu.iota {dimensions = array<i32: 1>} : vector<16x64xi32>
    %2 = vector.broadcast %0 : vector<16x1xi32> to vector<16x64xi32>
    %3 = arith.cmpi eq, %1, %2 : vector<16x64xi32>
    %4 = arith.extui %3 : vector<16x64xi1> to vector<16x64xi32>
    %5 = arith.sitofp %4 : vector<16x64xi32> to vector<16x64xf32>
    %6 = arith.truncf %5 : vector<16x64xf32> to vector<16x64xbf16>
    %c0_1 = arith.constant 0 : index
    %c0_2 = arith.constant 0 : index
    %7 = vector.load %arg1[%c0_1, %c0_2] : memref<64x128xbf16, #tpu.memory_space<vmem>>, vector<64x128xbf16>
    %cst = arith.constant dense<0.000000e+00> : vector<16x128xf32>
    %8 = tpu.matmul %6, %7, %cst {dimension_numbers = #tpu.dot_dimension_numbers<[1], [0], [0], [1], [0, 0, 1, 1], [], []>} : vector<16x64xbf16>, vector<64x128xbf16>, vector<16x128xf32> -> vector<16x128xf32>
    %cst_3 = arith.constant 0.000000e+00 : f32
    %9 = vector.broadcast %cst_3 : f32 to vector<16x640xf32>
    %c0_4 = arith.constant 0 : index
    %c0_5 = arith.constant 0 : index
    %10 = vector.load %arg11[%c0_4, %c0_5] : memref<16x640xf32, #tpu.memory_space<vmem>>, vector<16x640xf32>
    tpu.vector_store %arg11[%c0_4, %c0_5], %9 {strides = array<i32>} : memref<16x640xf32, #tpu.memory_space<vmem>>, vector<16x640xf32>,
    %11 = vector.extract_strided_slice %8 {offsets = [0, 0], sizes = [6, 128], strides = [1, 1]} : vector<16x128xf32> to vector<6x128xf32>
    %c2 = arith.constant 2 : index
    %c0_6 = arith.constant 0 : index
    %12 = vector.load %arg11[%c2, %c0_6] : memref<16x640xf32, #tpu.memory_space<vmem>>, vector<6x128xf32>
    tpu.vector_store %arg11[%c2, %c0_6], %11 {strides = array<i32>} : memref<16x640xf32, #tpu.memory_space<vmem>>, vector<6x128xf32>,
    %13 = vector.extract_strided_slice %8 {offsets = [0, 0], sizes = [7, 128], strides = [1, 1]} : vector<16x128xf32> to vector<7x128xf32>
    %c1 = arith.constant 1 : index
    %c128 = arith.constant 128 : index
    %14 = vector.load %arg11[%c1, %c128] : memref<16x640xf32, #tpu.memory_space<vmem>>, vector<7x128xf32>
    tpu.vector_store %arg11[%c1, %c128], %13 {strides = array<i32>} : memref<16x640xf32, #tpu.memory_space<vmem>>, vector<7x128xf32>,
    %15 = vector.extract_strided_slice %8 {offsets = [0, 0], sizes = [8, 128], strides = [1, 1]} : vector<16x128xf32> to vector<8x128xf32>
    %c0_7 = arith.constant 0 : index
    %c256 = arith.constant 256 : index
    %16 = vector.load %arg11[%c0_7, %c256] : memref<16x640xf32, #tpu.memory_space<vmem>>, vector<8x128xf32>
    tpu.vector_store %arg11[%c0_7, %c256], %15 {strides = array<i32>} : memref<16x640xf32, #tpu.memory_space<vmem>>, vector<8x128xf32>,
    %17 = vector.extract_strided_slice %8 {offsets = [1, 0], sizes = [7, 128], strides = [1, 1]} : vector<16x128xf32> to vector<7x128xf32>
    %c0_8 = arith.constant 0 : index
    %c384 = arith.constant 384 : index
    %18 = vector.load %arg11[%c0_8, %c384] : memref<16x640xf32, #tpu.memory_space<vmem>>, vector<7x128xf32>
    tpu.vector_store %arg11[%c0_8, %c384], %17 {strides = array<i32>} : memref<16x640xf32, #tpu.memory_space<vmem>>, vector<7x128xf32>,
    %19 = vector.extract_strided_slice %8 {offsets = [2, 0], sizes = [6, 128], strides = [1, 1]} : vector<16x128xf32> to vector<6x128xf32>
    %c0_9 = arith.constant 0 : index
    %c512 = arith.constant 512 : index
    %20 = vector.load %arg11[%c0_9, %c512] : memref<16x640xf32, #tpu.memory_space<vmem>>, vector<6x128xf32>
    tpu.vector_store %arg11[%c0_9, %c512], %19 {strides = array<i32>} : memref<16x640xf32, #tpu.memory_space<vmem>>, vector<6x128xf32>,
    %21 = vector.extract_strided_slice %8 {offsets = [8, 0], sizes = [6, 128], strides = [1, 1]} : vector<16x128xf32> to vector<6x128xf32>
    %c10 = arith.constant 10 : index
    %c0_10 = arith.constant 0 : index
    %22 = vector.load %arg11[%c10, %c0_10] : memref<16x640xf32, #tpu.memory_space<vmem>>, vector<6x128xf32>
    tpu.vector_store %arg11[%c10, %c0_10], %21 {strides = array<i32>} : memref<16x640xf32, #tpu.memory_space<vmem>>, vector<6x128xf32>,
    %23 = vector.extract_strided_slice %8 {offsets = [8, 0], sizes = [7, 128], strides = [1, 1]} : vector<16x128xf32> to vector<7x128xf32>
    %c9 = arith.constant 9 : index
    %c128_11 = arith.constant 128 : index
    %24 = vector.load %arg11[%c9, %c128_11] : memref<16x640xf32, #tpu.memory_space<vmem>>, vector<7x128xf32>
    tpu.vector_store %arg11[%c9, %c128_11], %23 {strides = array<i32>} : memref<16x640xf32, #tpu.memory_space<vmem>>, vector<7x128xf32>,
    %25 = vector.extract_strided_slice %8 {offsets = [8, 0], sizes = [8, 128], strides = [1, 1]} : vector<16x128xf32> to vector<8x128xf32>
    %c8 = arith.constant 8 : index
    %c256_12 = arith.constant 256 : index
    %26 = vector.load %arg11[%c8, %c256_12] : memref<16x640xf32, #tpu.memory_space<vmem>>, vector<8x128xf32>
    tpu.vector_store %arg11[%c8, %c256_12], %25 {strides = array<i32>} : memref<16x640xf32, #tpu.memory_space<vmem>>, vector<8x128xf32>,
    %27 = vector.extract_strided_slice %8 {offsets = [9, 0], sizes = [7, 128], strides = [1, 1]} : vector<16x128xf32> to vector<7x128xf32>
    %c8_13 = arith.constant 8 : index
    %c384_14 = arith.constant 384 : index
    %28 = vector.load %arg11[%c8_13, %c384_14] : memref<16x640xf32, #tpu.memory_space<vmem>>, vector<7x128xf32>
    tpu.vector_store %arg11[%c8_13, %c384_14], %27 {strides = array<i32>} : memref<16x640xf32, #tpu.memory_space<vmem>>, vector<7x128xf32>,
    %29 = vector.extract_strided_slice %8 {offsets = [10, 0], sizes = [6, 128], strides = [1, 1]} : vector<16x128xf32> to vector<6x128xf32>
    %c8_15 = arith.constant 8 : index
    %c512_16 = arith.constant 512 : index
    %30 = vector.load %arg11[%c8_15, %c512_16] : memref<16x640xf32, #tpu.memory_space<vmem>>, vector<6x128xf32>
    tpu.vector_store %arg11[%c8_15, %c512_16], %29 {strides = array<i32>} : memref<16x640xf32, #tpu.memory_space<vmem>>, vector<6x128xf32>,
    %c0_17 = arith.constant 0 : index
    %c0_18 = arith.constant 0 : index
    %31 = vector.load %arg11[%c0_17, %c0_18] : memref<16x640xf32, #tpu.memory_space<vmem>>, vector<16x640xf32>
    %32 = arith.truncf %31 : vector<16x640xf32> to vector<16x640xbf16>
    %c0_19 = arith.constant 0 : index
    %c0_20 = arith.constant 0 : index
    %33 = vector.load %arg2[%c0_19, %c0_20] : memref<640x384xbf16, #tpu.memory_space<vmem>>, vector<640x384xbf16>
    %cst_21 = arith.constant dense<0.000000e+00> : vector<16x384xf32>
    %34 = tpu.matmul %32, %33, %cst_21 {dimension_numbers = #tpu.dot_dimension_numbers<[1], [0], [0], [1], [0, 0, 1, 1], [], []>} : vector<16x640xbf16>, vector<640x384xbf16>, vector<16x384xf32> -> vector<16x384xf32>
    %c0_22 = arith.constant 0 : index
    %c0_23 = arith.constant 0 : index
    %35 = vector.load %arg3[%c0_22, %c0_23] : memref<1x384xf32, #tpu.memory_space<vmem>>, vector<1x384xf32>
    %36 = vector.broadcast %35 : vector<1x384xf32> to vector<16x384xf32>
    %37 = arith.addf %34, %36 : vector<16x384xf32>
    %cst_24 = arith.constant 0.000000e+00 : f32
    %38 = vector.broadcast %cst_24 : f32 to vector<16x384xf32>
    %39 = arith.maximumf %37, %38 : vector<16x384xf32>
    %40 = vector.shape_cast %39 : vector<16x384xf32> to vector<2x8x384xf32>
    %cst_25 = arith.constant dense<0xFF800000> : vector<2x384xf32>
    %41 = vector.multi_reduction <maximumf>, %40, %cst_25 [1] : vector<2x8x384xf32> to vector<2x384xf32>
    %42 = vector.extract_strided_slice %41 {offsets = [0, 0], sizes = [2, 128], strides = [1, 1]} : vector<2x384xf32> to vector<2x128xf32>
    %43 = vector.extract_strided_slice %41 {offsets = [0, 128], sizes = [2, 128], strides = [1, 1]} : vector<2x384xf32> to vector<2x128xf32>
    %44 = arith.addf %42, %43 : vector<2x128xf32>
    %45 = vector.extract_strided_slice %41 {offsets = [0, 256], sizes = [2, 128], strides = [1, 1]} : vector<2x384xf32> to vector<2x128xf32>
    %46 = arith.addf %44, %45 : vector<2x128xf32>
    %47 = arith.truncf %46 : vector<2x128xf32> to vector<2x128xbf16>
    %c0_26 = arith.constant 0 : index
    %c0_27 = arith.constant 0 : index
    %48 = vector.load %arg4[%c0_26, %c0_27] : memref<128x64xbf16, #tpu.memory_space<vmem>>, vector<128x64xbf16>
    %cst_28 = arith.constant dense<0.000000e+00> : vector<2x64xf32>
    %49 = tpu.matmul %47, %48, %cst_28 {dimension_numbers = #tpu.dot_dimension_numbers<[1], [0], [0], [1], [0, 0, 1, 1], [], []>} : vector<2x128xbf16>, vector<128x64xbf16>, vector<2x64xf32> -> vector<2x64xf32>
    %c0_29 = arith.constant 0 : index
    %c0_30 = arith.constant 0 : index
    %50 = vector.load %arg5[%c0_29, %c0_30] : memref<1x64xf32, #tpu.memory_space<vmem>>, vector<1x64xf32>
    %51 = vector.broadcast %50 : vector<1x64xf32> to vector<2x64xf32>
    %52 = arith.addf %49, %51 : vector<2x64xf32>
    %cst_31 = arith.constant 0.000000e+00 : f32
    %53 = vector.broadcast %cst_31 : f32 to vector<2x64xf32>
    %54 = arith.cmpf ogt, %52, %53 : vector<2x64xf32>
    %cst_32 = arith.constant 0.00999999977 : f32
    %55 = vector.broadcast %cst_32 : f32 to vector<2x64xf32>
    %56 = arith.mulf %55, %52 : vector<2x64xf32>
    %57 = arith.select %54, %52, %56 : vector<2x64xi1>, vector<2x64xf32>
    %58 = arith.truncf %57 : vector<2x64xf32> to vector<2x64xbf16>
    %c0_33 = arith.constant 0 : index
    %c0_34 = arith.constant 0 : index
    %59 = vector.load %arg6[%c0_33, %c0_34] : memref<64x3xbf16, #tpu.memory_space<vmem>>, vector<64x3xbf16>
    %cst_35 = arith.constant dense<0.000000e+00> : vector<2x3xf32>
    %60 = tpu.matmul %58, %59, %cst_35 {dimension_numbers = #tpu.dot_dimension_numbers<[1], [0], [0], [1], [0, 0, 1, 1], [], []>} : vector<2x64xbf16>, vector<64x3xbf16>, vector<2x3xf32> -> vector<2x3xf32>
    %c0_36 = arith.constant 0 : index
    %c0_37 = arith.constant 0 : index
    %61 = vector.load %arg7[%c0_36, %c0_37] : memref<1x3xf32, #tpu.memory_space<vmem>>, vector<1x3xf32>
    %62 = vector.broadcast %61 : vector<1x3xf32> to vector<2x3xf32>
    %63 = arith.addf %60, %62 : vector<2x3xf32>
    %cst_38 = arith.constant dense<0xFF800000> : vector<2xf32>
    %64 = vector.multi_reduction <maximumf>, %63, %cst_38 [1] : vector<2x3xf32> to vector<2xf32>
    %65 = vector.shape_cast %64 : vector<2xf32> to vector<2x1xf32>
    %66 = vector.broadcast %65 : vector<2x1xf32> to vector<2x3xf32>
    %67 = arith.subf %63, %66 : vector<2x3xf32>
    %68 = math.exp %67 : vector<2x3xf32>
    %cst_39 = arith.constant dense<0.000000e+00> : vector<2xf32>
    %69 = vector.multi_reduction <add>, %68, %cst_39 [1] : vector<2x3xf32> to vector<2xf32>
    %70 = vector.shape_cast %69 : vector<2xf32> to vector<2x1xf32>
    %71 = tpu.reciprocal %70 {approx = true} : vector<2x1xf32> -> vector<2x1xf32>
    %72 = vector.broadcast %71 : vector<2x1xf32> to vector<2x3xf32>
    %73 = arith.mulf %68, %72 : vector<2x3xf32>
    %cst_40 = arith.constant dense<0xFF800000> : vector<2xf32>
    %74 = vector.multi_reduction <maximumf>, %73, %cst_40 [1] : vector<2x3xf32> to vector<2xf32>
    %75 = vector.shape_cast %74 : vector<2xf32> to vector<2x1xf32>
    %76 = tpu.iota {dimensions = array<i32: 1>} : vector<2x3xi32>
    %77 = vector.broadcast %75 : vector<2x1xf32> to vector<2x3xf32>
    %78 = arith.cmpf oge, %73, %77 : vector<2x3xf32>
    %c3_i32 = arith.constant 3 : i32
    %79 = vector.broadcast %c3_i32 : i32 to vector<2x3xi32>
    %80 = arith.select %78, %76, %79 : vector<2x3xi1>, vector<2x3xi32>
    %cst_41 = arith.constant dense<2147483647> : vector<2xi32>
    %81 = vector.multi_reduction <minsi>, %80, %cst_41 [1] : vector<2x3xi32> to vector<2xi32>
    %82 = vector.shape_cast %81 : vector<2xi32> to vector<2x1xi32>
    %c0_42 = arith.constant 0 : index
    %c0_43 = arith.constant 0 : index
    %83 = vector.load %arg8[%c0_42, %c0_43] : memref<2x3xf32, #tpu.memory_space<vmem>>, vector<2x3xf32>
    tpu.vector_store %arg8[%c0_42, %c0_43], %63 {strides = array<i32>} : memref<2x3xf32, #tpu.memory_space<vmem>>, vector<2x3xf32>,
    %c0_44 = arith.constant 0 : index
    %c0_45 = arith.constant 0 : index
    %84 = vector.load %arg9[%c0_44, %c0_45] : memref<2x1xf32, #tpu.memory_space<vmem>>, vector<2x1xf32>
    tpu.vector_store %arg9[%c0_44, %c0_45], %75 {strides = array<i32>} : memref<2x1xf32, #tpu.memory_space<vmem>>, vector<2x1xf32>,
    %c0_46 = arith.constant 0 : index
    %c0_47 = arith.constant 0 : index
    %85 = vector.load %arg10[%c0_46, %c0_47] : memref<2x1xi32, #tpu.memory_space<vmem>>, vector<2x1xi32>
    tpu.vector_store %arg10[%c0_46, %c0_47], %82 {strides = array<i32>} : memref<2x1xi32, #tpu.memory_space<vmem>>, vector<2x1xi32>,
    return
  }
}

</mosaic_0001>

<llo_original>
// kernel: dummy_model_forward.1
$region0: #{dummy_model_forward.1}
  #allocation0 [shape = 'u32[]', space=smem, size = 0x4, offset = 0x4, fixed_abs, tag = 'smem constant byte address 0x4 - core index']
  #allocation1 [shape = 'u32[144,128]{1,0:T(1,128)}', space=vmem, size = 0x12000, scoped, tag = 'internal scratch']
  #allocation2 [shape = 'f32[16,640]{1,0:T(8,128)}', space=vmem, size = 0xa000, scoped, tag = 'scratch operand']
  %s0 = inlined_call_operand.vmem [shape: s32[16,1], index: 0, kind: input, shape index: {}]
  %s1 = inlined_call_operand.vmem [shape: bf16[64,128], index: 1, kind: input, shape index: {}]
  %s2 = inlined_call_operand.hbm [shape: bf16[640,384], index: 2, kind: input, shape index: {}]
  %s3 = inlined_call_operand.vmem [shape: f32[1,384], index: 3, kind: input, shape index: {}]
  %s4 = inlined_call_operand.vmem [shape: bf16[128,64], index: 4, kind: input, shape index: {}]
  %s5 = inlined_call_operand.vmem [shape: f32[1,64], index: 5, kind: input, shape index: {}]
  %s6 = inlined_call_operand.vmem [shape: bf16[64,3], index: 6, kind: input, shape index: {}]
  %s7 = inlined_call_operand.vmem [shape: f32[1,3], index: 7, kind: input, shape index: {}]
  %s8 = inlined_call_operand.vmem [shape: f32[2,3], index: 8, kind: output, shape index: {0}]
  %s9 = inlined_call_operand.vmem [shape: f32[2,1], index: 9, kind: output, shape index: {1}]
  %s10 = inlined_call_operand.vmem [shape: s32[2,1], index: 10, kind: output, shape index: {2}]
  %11 = xla_tuple %s8, %s9, %s10
  %s12 = sld [smem:[#allocation0]]
  $region62: #{dummy_model_forward.1} parent=0
    _
  %s14 = ssub.s32 1, %s12
  %s15 = scalar_select 0, %s14, %s12
  $region1: #{dummy_model_forward.1} parent=0
    #allocation3 [shape = 'u8[491520]{0}', space=vmem, size = 0x78000, scoped, tag = 'input window, operand 2, single buffered']
    #allocation4 [shape = 's32[1]{0}', space=sflag, size = 0x4, scoped, tag = 'scoped memory for dummy_model_forward.1']
    %16 = vsyncpa [#allocation4], 0
    // Predicated region
    $region2: #{dummy_model_forward.1} parent=1 // pred_check
      _
    $region3: #{dummy_model_forward.1} parent=1 // pred_check_branch
      %18 = sbr.rel (0) target = $region5
    $region4: #{dummy_model_forward.1} parent=1 // pred_region
      _
    $region5: #{dummy_model_forward.1} parent=1 // pred_fallthru
      _
    // Predicated region
    $region6: #{dummy_model_forward.1} parent=1 // pred_check
      _
    $region7: #{dummy_model_forward.1} parent=1 // pred_check_branch
      %20 = sbr.rel (0) target = $region9
    $region8: #{dummy_model_forward.1} parent=1 // pred_region
      _
    $region9: #{dummy_model_forward.1} parent=1 // pred_fallthru
      _
    // Predicated region
    $region10: #{dummy_model_forward.1} parent=1 // pred_check
      _
    $region11: #{dummy_model_forward.1} parent=1 // pred_check_branch
      %22 = sbr.rel (0) target = $region13
    $region12: #{dummy_model_forward.1} parent=1 // pred_region
      %s24 = ssub.s32 15360, 15360
      %25 = vsyncadd [#allocation4], %s24
      %s26 = sshll.u32 [#allocation3], 4
      %s27 = int_to_ptr.vmem [resolvable:$true] %s26
      %32 = dma.hbm_to_vmem [thread:$0]  %s2, 15360, %s27, [#allocation4], 192, 192, 12
    $region13: #{dummy_model_forward.1} parent=1 // pred_fallthru
      _
    // Predicated region
    $region14: #{dummy_model_forward.1} parent=1 // pred_check
      _
    $region15: #{dummy_model_forward.1} parent=1 // pred_check_branch
      %34 = sbr.rel (0) target = $region17
    $region16: #{dummy_model_forward.1} parent=1 // pred_region
      _
    $region17: #{dummy_model_forward.1} parent=1 // pred_fallthru
      _
    // Predicated region
    $region18: #{dummy_model_forward.1} parent=1 // pred_check
      _
    $region19: #{dummy_model_forward.1} parent=1 // pred_check_branch
      %36 = sbr.rel (0) target = $region21
    $region20: #{dummy_model_forward.1} parent=1 // pred_region
      _
    $region21: #{dummy_model_forward.1} parent=1 // pred_fallthru
      _
    // Predicated region
    $region22: #{dummy_model_forward.1} parent=1 // pred_check
      _
    $region23: #{dummy_model_forward.1} parent=1 // pred_check_branch
      %38 = sbr.rel (0) target = $region25
    $region24: #{dummy_model_forward.1} parent=1 // pred_region
      _
    $region25: #{dummy_model_forward.1} parent=1 // pred_fallthru
      _
    // Predicated region
    $region26: #{dummy_model_forward.1} parent=1 // pred_check
      _
    $region27: #{dummy_model_forward.1} parent=1 // pred_check_branch
      %40 = sbr.rel (0) target = $region29
    $region28: #{dummy_model_forward.1} parent=1 // pred_region
      _
    $region29: #{dummy_model_forward.1} parent=1 // pred_fallthru
      _
    // Predicated region
    $region30: #{dummy_model_forward.1} parent=1 // pred_check
      _
    $region31: #{dummy_model_forward.1} parent=1 // pred_check_branch
      %42 = sbr.rel (0) target = $region33
    $region32: #{dummy_model_forward.1} parent=1 // pred_region
      _
    $region33: #{dummy_model_forward.1} parent=1 // pred_fallthru
      _
    // Predicated region
    $region34: #{dummy_model_forward.1} parent=1 // pred_check
      _
    $region35: #{dummy_model_forward.1} parent=1 // pred_check_branch
      %44 = sbr.rel (0) target = $region37
    $region36: #{dummy_model_forward.1} parent=1 // pred_region
      %45 = dma.done [#allocation4], 15360
    $region37: #{dummy_model_forward.1} parent=1 // pred_fallthru
      _
    %v47 = vld [vmem:[%s0] sm:$0xff]
    %v48 = vld [vmem:[%s0 + $0x8] sm:$0xff]
    %v49 = vlaneseq
    %v50 = vand.u32 %v49, 127
    %51 = vset.pattern.permute.xlu0 0
    %52 = vperm.xlu0 %51, %v47
    %v53 = vpop.permute.xlu0 %52
    %54 = vset.pattern.permute.xlu0 0
    %55 = vperm.xlu0 %54, %v48
    %v56 = vpop.permute.xlu0 %55
    %vm57 = vcmp.eq.s32.totalorder %v50, %v53
    %vm58 = vcmp.eq.s32.totalorder %v50, %v56
    %v59 = vsel %vm57, 1, 0
    %v60 = vsel %vm58, 1, 0
    %v61 = vcvt.s32.f32 %v59
    %v62 = vcvt.s32.f32 %v60
    %v63 = vpack.c.bf16 %v62, %v61
    %v64 = vld [vmem:[%s1] sm:$0xf]
    %v65 = vld [vmem:[%s1 + $0x4] sm:$0xf]
    %v66 = vld [vmem:[%s1 + $0x8] sm:$0xf]
    %v67 = vld [vmem:[%s1 + $0xc] sm:$0xf]
    %v68 = vld [vmem:[%s1 + $0x10] sm:$0xf]
    %v69 = vld [vmem:[%s1 + $0x14] sm:$0xf]
    %v70 = vld [vmem:[%s1 + $0x18] sm:$0xf]
    %v71 = vld [vmem:[%s1 + $0x1c] sm:$0xf]
    %v80 = vunpack.c.l.b16 %v64
    %v81 = vunpack.c.l.b16 %v65
    %v82 = vunpack.c.l.b16 %v66
    %v83 = vunpack.c.l.b16 %v67
    %v84 = vunpack.c.l.b16 %v68
    %v85 = vunpack.c.l.b16 %v69
    %v86 = vunpack.c.l.b16 %v70
    %v87 = vunpack.c.l.b16 %v71
    %v88 = vpack.c.b16 %v81, %v80
    %v89 = vpack.c.b16 %v83, %v82
    %v90 = vpack.c.b16 %v85, %v84
    %v91 = vpack.c.b16 %v87, %v86
    %vm96 = vcmask 523264
    %v98 = vsel %vm96, %v63, 0
    %100 = vmatprep.subr.bf16.mxu0 0
    %101 = vmatpush1.bf16.msra.mxu0 0
    %102 = vmatprep.subr.bf16.mxu0 0
    %103 = vmatpush1.bf16.msra.mxu0 0
    %104 = vmatprep.subr.bf16.mxu0 0
    %105 = vmatpush1.bf16.msra.mxu0 0
    %106 = vmatprep.subr.bf16.mxu0 0
    %107 = vmatpush1.bf16.msra.mxu0 0
    %108 = vmatprep.subr.bf16.mxu0 0
    %109 = vmatpush1.bf16.msra.mxu0 %v91
    %110 = vmatprep.subr.bf16.mxu0 0
    %111 = vmatpush1.bf16.msra.mxu0 %v90
    %112 = vmatprep.subr.bf16.mxu0 0
    %113 = vmatpush1.bf16.msra.mxu0 %v89
    %114 = vmatprep.subr.bf16.mxu0 0
    %115 = vmatpush1.bf16.msra.mxu0 %v88
    %116 = vmatprep.subr.bf16.mxu0 0
    %117 = vmatpush2.bf16.msra.mxu0 0
    %118 = vmatprep.subr.bf16.mxu0 0
    %119 = vmatpush2.bf16.msra.mxu0 0
    %120 = vmatprep.subr.bf16.mxu0 0
    %121 = vmatpush2.bf16.msra.mxu0 0
    %122 = vmatprep.subr.bf16.mxu0 0
    %123 = vmatpush2.bf16.msra.mxu0 0
    %124 = vmatprep.subr.bf16.mxu0 0
    %125 = vmatpush2.bf16.msra.mxu0 0
    %126 = vmatprep.subr.bf16.mxu0 0
    %127 = vmatpush2.bf16.msra.mxu0 0
    %128 = vmatprep.subr.bf16.mxu0 0
    %129 = vmatpush2.bf16.msra.mxu0 0
    %130 = vmatprep.subr.bf16.mxu0 0
    %131 = vmatpush2.bf16.msra.mxu0 0
    %132 = vmatprep.mubr.bf16.mxu0 0
    %133 = vmatmul.mubr.bf16.gmra.mxu0 %v98
    %v134 = vpop.f32.mrf.mxu0
    %v135 = vadd.f32 0.0, %v134
    %v136 = vpop.f32.mrf.mxu0
    %v137 = vpop.f32.mrf.mxu0
    %v138 = vadd.f32 0.0, %v137
    %v139 = vpop.f32.mrf.mxu0
    %140 = vdwg.mxu0
    %141 = vst [vmem:[#allocation2] sm:$0xff] 0.0
    %142 = vst [vmem:[#allocation2 + $0x8] sm:$0xff] 0.0
    %143 = vst [vmem:[#allocation2 + $0x10] sm:$0xff] 0.0
    %144 = vst [vmem:[#allocation2 + $0x18] sm:$0xff] 0.0
    %145 = vst [vmem:[#allocation2 + $0x20] sm:$0xff] 0.0
    %146 = vst [vmem:[#allocation2 + $0x28] sm:$0xff] 0.0
    %147 = vst [vmem:[#allocation2 + $0x30] sm:$0xff] 0.0
    %148 = vst [vmem:[#allocation2 + $0x38] sm:$0xff] 0.0
    %149 = vst [vmem:[#allocation2 + $0x40] sm:$0xff] 0.0
    %150 = vst [vmem:[#allocation2 + $0x48] sm:$0xff] 0.0
    %v152 = vrot.slane %v135, 6
    %154 = vst [vmem:[#allocation2] sm:$0xfc] %v152
    %v155 = vrot.slane %v135, 7
    %157 = vst [vmem:[#allocation2 + $0x8] sm:$0xfe] %v155
    %158 = vst [vmem:[#allocation2 + $0x10] sm:$0xff] %v135
    %v159 = vrot.slane %v135, 1
    %161 = vst [vmem:[#allocation2 + $0x18] sm:$0x7f] %v159
    %v162 = vrot.slane %v135, 2
    %164 = vst [vmem:[#allocation2 + $0x20] sm:$0x3f] %v162
    %v166 = vrot.slane %v138, 6
    %168 = vst [vmem:[#allocation2 + $0x28] sm:$0xfc] %v166
    %v169 = vrot.slane %v138, 7
    %171 = vst [vmem:[#allocation2 + $0x30] sm:$0xfe] %v169
    %172 = vst [vmem:[#allocation2 + $0x38] sm:$0xff] %v138
    %v173 = vrot.slane %v138, 1
    %175 = vst [vmem:[#allocation2 + $0x40] sm:$0x7f] %v173
    %v176 = vrot.slane %v138, 2
    %178 = vst [vmem:[#allocation2 + $0x48] sm:$0x3f] %v176
    %v179 = vld [vmem:[#allocation2] sm:$0xff]
    %v180 = vld [vmem:[#allocation2 + $0x8] sm:$0xff]
    %v181 = vld [vmem:[#allocation2 + $0x10] sm:$0xff]
    %v182 = vld [vmem:[#allocation2 + $0x18] sm:$0xff]
    %v183 = vld [vmem:[#allocation2 + $0x20] sm:$0xff]
    %v184 = vld [vmem:[#allocation2 + $0x28] sm:$0xff]
    %v185 = vld [vmem:[#allocation2 + $0x30] sm:$0xff]
    %v186 = vld [vmem:[#allocation2 + $0x38] sm:$0xff]
    %v187 = vld [vmem:[#allocation2 + $0x40] sm:$0xff]
    %v188 = vld [vmem:[#allocation2 + $0x48] sm:$0xff]
    %v189 = vpack.c.bf16 %v184, %v179
    %v190 = vpack.c.bf16 %v185, %v180
    %v191 = vpack.c.bf16 %v186, %v181
    %v192 = vpack.c.bf16 %v187, %v182
    %v193 = vpack.c.bf16 %v188, %v183
    %v194 = vld [vmem:[#allocation3] sm:$0xff]
    %v195 = vld [vmem:[#allocation3 + $0x8] sm:$0xf]
    %v196 = vld [vmem:[#allocation3 + $0xc] sm:$0xff]
    %v197 = vld [vmem:[#allocation3 + $0x14] sm:$0xf]
    %v198 = vld [vmem:[#allocation3 + $0x18] sm:$0xff]
    %v199 = vld [vmem:[#allocation3 + $0x20] sm:$0xf]
    %v200 = vld [vmem:[#allocation3 + $0x24] sm:$0xff]
    %v201 = vld [vmem:[#allocation3 + $0x2c] sm:$0xf]
    %v202 = vld [vmem:[#allocation3 + $0x30] sm:$0xff]
    %v203 = vld [vmem:[#allocation3 + $0x38] sm:$0xf]
    %v204 = vld [vmem:[#allocation3 + $0x3c] sm:$0xff]
    %v205 = vld [vmem:[#allocation3 + $0x44] sm:$0xf]
    %v206 = vld [vmem:[#allocation3 + $0x48] sm:$0xff]
    %v207 = vld [vmem:[#allocation3 + $0x50] sm:$0xf]
    %v208 = vld [vmem:[#allocation3 + $0x54] sm:$0xff]
    %v209 = vld [vmem:[#allocation3 + $0x5c] sm:$0xf]
    %v210 = vld [vmem:[#allocation3 + $0x60] sm:$0xff]
    %v211 = vld [vmem:[#allocation3 + $0x68] sm:$0xf]
    %v212 = vld [vmem:[#allocation3 + $0x6c] sm:$0xff]
    %v213 = vld [vmem:[#allocation3 + $0x74] sm:$0xf]
    %v214 = vld [vmem:[#allocation3 + $0x78] sm:$0xff]
    %v215 = vld [vmem:[#allocation3 + $0x80] sm:$0xf]
    %v216 = vld [vmem:[#allocation3 + $0x84] sm:$0xff]
    %v217 = vld [vmem:[#allocation3 + $0x8c] sm:$0xf]
    %v218 = vld [vmem:[#allocation3 + $0x90] sm:$0xff]
    %v219 = vld [vmem:[#allocation3 + $0x98] sm:$0xf]
    %v220 = vld [vmem:[#allocation3 + $0x9c] sm:$0xff]
    %v221 = vld [vmem:[#allocation3 + $0xa4] sm:$0xf]
    %v222 = vld [vmem:[#allocation3 + $0xa8] sm:$0xff]
    %v223 = vld [vmem:[#allocation3 + $0xb0] sm:$0xf]
    %v224 = vld [vmem:[#allocation3 + $0xb4] sm:$0xff]
    %v225 = vld [vmem:[#allocation3 + $0xbc] sm:$0xf]
    %v226 = vld [vmem:[#allocation3 + $0xc0] sm:$0xff]
    %v227 = vld [vmem:[#allocation3 + $0xc8] sm:$0xf]
    %v228 = vld [vmem:[#allocation3 + $0xcc] sm:$0xff]
    %v229 = vld [vmem:[#allocation3 + $0xd4] sm:$0xf]
    %v230 = vld [vmem:[#allocation3 + $0xd8] sm:$0xff]
    %v231 = vld [vmem:[#allocation3 + $0xe0] sm:$0xf]
    %v232 = vld [vmem:[#allocation3 + $0xe4] sm:$0xff]
    %v233 = vld [vmem:[#allocation3 + $0xec] sm:$0xf]
    %v234 = vld [vmem:[#allocation3 + $0xf0] sm:$0xff]
    %v235 = vld [vmem:[#allocation3 + $0xf8] sm:$0xf]
    %v236 = vld [vmem:[#allocation3 + $0xfc] sm:$0xff]
    %v237 = vld [vmem:[#allocation3 + $0x104] sm:$0xf]
    %v238 = vld [vmem:[#allocation3 + $0x108] sm:$0xff]
    %v239 = vld [vmem:[#allocation3 + $0x110] sm:$0xf]
    %v240 = vld [vmem:[#allocation3 + $0x114] sm:$0xff]
    %v241 = vld [vmem:[#allocation3 + $0x11c] sm:$0xf]
    %v242 = vld [vmem:[#allocation3 + $0x120] sm:$0xff]
    %v243 = vld [vmem:[#allocation3 + $0x128] sm:$0xf]
    %v244 = vld [vmem:[#allocation3 + $0x12c] sm:$0xff]
    %v245 = vld [vmem:[#allocation3 + $0x134] sm:$0xf]
    %v246 = vld [vmem:[#allocation3 + $0x138] sm:$0xff]
    %v247 = vld [vmem:[#allocation3 + $0x140] sm:$0xf]
    %v248 = vld [vmem:[#allocation3 + $0x144] sm:$0xff]
    %v249 = vld [vmem:[#allocation3 + $0x14c] sm:$0xf]
    %v250 = vld [vmem:[#allocation3 + $0x150] sm:$0xff]
    %v251 = vld [vmem:[#allocation3 + $0x158] sm:$0xf]
    %v252 = vld [vmem:[#allocation3 + $0x15c] sm:$0xff]
    %v253 = vld [vmem:[#allocation3 + $0x164] sm:$0xf]
    %v254 = vld [vmem:[#allocation3 + $0x168] sm:$0xff]
    %v255 = vld [vmem:[#allocation3 + $0x170] sm:$0xf]
    %v256 = vld [vmem:[#allocation3 + $0x174] sm:$0xff]
    %v257 = vld [vmem:[#allocation3 + $0x17c] sm:$0xf]
    %v258 = vld [vmem:[#allocation3 + $0x180] sm:$0xff]
    %v259 = vld [vmem:[#allocation3 + $0x188] sm:$0xf]
    %v260 = vld [vmem:[#allocation3 + $0x18c] sm:$0xff]
    %v261 = vld [vmem:[#allocation3 + $0x194] sm:$0xf]
    %v262 = vld [vmem:[#allocation3 + $0x198] sm:$0xff]
    %v263 = vld [vmem:[#allocation3 + $0x1a0] sm:$0xf]
    %v264 = vld [vmem:[#allocation3 + $0x1a4] sm:$0xff]
    %v265 = vld [vmem:[#allocation3 + $0x1ac] sm:$0xf]
    %v266 = vld [vmem:[#allocation3 + $0x1b0] sm:$0xff]
    %v267 = vld [vmem:[#allocation3 + $0x1b8] sm:$0xf]
    %v268 = vld [vmem:[#allocation3 + $0x1bc] sm:$0xff]
    %v269 = vld [vmem:[#allocation3 + $0x1c4] sm:$0xf]
    %v270 = vld [vmem:[#allocation3 + $0x1c8] sm:$0xff]
    %v271 = vld [vmem:[#allocation3 + $0x1d0] sm:$0xf]
    %v272 = vld [vmem:[#allocation3 + $0x1d4] sm:$0xff]
    %v273 = vld [vmem:[#allocation3 + $0x1dc] sm:$0xf]
    %v274 = vld [vmem:[#allocation3 + $0x1e0] sm:$0xff]
    %v275 = vld [vmem:[#allocation3 + $0x1e8] sm:$0xf]
    %v276 = vld [vmem:[#allocation3 + $0x1ec] sm:$0xff]
    %v277 = vld [vmem:[#allocation3 + $0x1f4] sm:$0xf]
    %v278 = vld [vmem:[#allocation3 + $0x1f8] sm:$0xff]
    %v279 = vld [vmem:[#allocation3 + $0x200] sm:$0xf]
    %v280 = vld [vmem:[#allocation3 + $0x204] sm:$0xff]
    %v281 = vld [vmem:[#allocation3 + $0x20c] sm:$0xf]
    %v282 = vld [vmem:[#allocation3 + $0x210] sm:$0xff]
    %v283 = vld [vmem:[#allocation3 + $0x218] sm:$0xf]
    %v284 = vld [vmem:[#allocation3 + $0x21c] sm:$0xff]
    %v285 = vld [vmem:[#allocation3 + $0x224] sm:$0xf]
    %v286 = vld [vmem:[#allocation3 + $0x228] sm:$0xff]
    %v287 = vld [vmem:[#allocation3 + $0x230] sm:$0xf]
    %v288 = vld [vmem:[#allocation3 + $0x234] sm:$0xff]
    %v289 = vld [vmem:[#allocation3 + $0x23c] sm:$0xf]
    %v290 = vld [vmem:[#allocation3 + $0x240] sm:$0xff]
    %v291 = vld [vmem:[#allocation3 + $0x248] sm:$0xf]
    %v292 = vld [vmem:[#allocation3 + $0x24c] sm:$0xff]
    %v293 = vld [vmem:[#allocation3 + $0x254] sm:$0xf]
    %v294 = vld [vmem:[#allocation3 + $0x258] sm:$0xff]
    %v295 = vld [vmem:[#allocation3 + $0x260] sm:$0xf]
    %v296 = vld [vmem:[#allocation3 + $0x264] sm:$0xff]
    %v297 = vld [vmem:[#allocation3 + $0x26c] sm:$0xf]
    %v298 = vld [vmem:[#allocation3 + $0x270] sm:$0xff]
    %v299 = vld [vmem:[#allocation3 + $0x278] sm:$0xf]
    %v300 = vld [vmem:[#allocation3 + $0x27c] sm:$0xff]
    %v301 = vld [vmem:[#allocation3 + $0x284] sm:$0xf]
    %v302 = vld [vmem:[#allocation3 + $0x288] sm:$0xff]
    %v303 = vld [vmem:[#allocation3 + $0x290] sm:$0xf]
    %v304 = vld [vmem:[#allocation3 + $0x294] sm:$0xff]
    %v305 = vld [vmem:[#allocation3 + $0x29c] sm:$0xf]
    %v306 = vld [vmem:[#allocation3 + $0x2a0] sm:$0xff]
    %v307 = vld [vmem:[#allocation3 + $0x2a8] sm:$0xf]
    %v308 = vld [vmem:[#allocation3 + $0x2ac] sm:$0xff]
    %v309 = vld [vmem:[#allocation3 + $0x2b4] sm:$0xf]
    %v310 = vld [vmem:[#allocation3 + $0x2b8] sm:$0xff]
    %v311 = vld [vmem:[#allocation3 + $0x2c0] sm:$0xf]
    %v312 = vld [vmem:[#allocation3 + $0x2c4] sm:$0xff]
    %v313 = vld [vmem:[#allocation3 + $0x2cc] sm:$0xf]
    %v314 = vld [vmem:[#allocation3 + $0x2d0] sm:$0xff]
    %v315 = vld [vmem:[#allocation3 + $0x2d8] sm:$0xf]
    %v316 = vld [vmem:[#allocation3 + $0x2dc] sm:$0xff]
    %v317 = vld [vmem:[#allocation3 + $0x2e4] sm:$0xf]
    %v318 = vld [vmem:[#allocation3 + $0x2e8] sm:$0xff]
    %v319 = vld [vmem:[#allocation3 + $0x2f0] sm:$0xf]
    %v320 = vld [vmem:[#allocation3 + $0x2f4] sm:$0xff]
    %v321 = vld [vmem:[#allocation3 + $0x2fc] sm:$0xf]
    %v322 = vld [vmem:[#allocation3 + $0x300] sm:$0xff]
    %v323 = vld [vmem:[#allocation3 + $0x308] sm:$0xf]
    %v324 = vld [vmem:[#allocation3 + $0x30c] sm:$0xff]
    %v325 = vld [vmem:[#allocation3 + $0x314] sm:$0xf]
    %v326 = vld [vmem:[#allocation3 + $0x318] sm:$0xff]
    %v327 = vld [vmem:[#allocation3 + $0x320] sm:$0xf]
    %v328 = vld [vmem:[#allocation3 + $0x324] sm:$0xff]
    %v329 = vld [vmem:[#allocation3 + $0x32c] sm:$0xf]
    %v330 = vld [vmem:[#allocation3 + $0x330] sm:$0xff]
    %v331 = vld [vmem:[#allocation3 + $0x338] sm:$0xf]
    %v332 = vld [vmem:[#allocation3 + $0x33c] sm:$0xff]
    %v333 = vld [vmem:[#allocation3 + $0x344] sm:$0xf]
    %v334 = vld [vmem:[#allocation3 + $0x348] sm:$0xff]
    %v335 = vld [vmem:[#allocation3 + $0x350] sm:$0xf]
    %v336 = vld [vmem:[#allocation3 + $0x354] sm:$0xff]
    %v337 = vld [vmem:[#allocation3 + $0x35c] sm:$0xf]
    %v338 = vld [vmem:[#allocation3 + $0x360] sm:$0xff]
    %v339 = vld [vmem:[#allocation3 + $0x368] sm:$0xf]
    %v340 = vld [vmem:[#allocation3 + $0x36c] sm:$0xff]
    %v341 = vld [vmem:[#allocation3 + $0x374] sm:$0xf]
    %v342 = vld [vmem:[#allocation3 + $0x378] sm:$0xff]
    %v343 = vld [vmem:[#allocation3 + $0x380] sm:$0xf]
    %v344 = vld [vmem:[#allocation3 + $0x384] sm:$0xff]
    %v345 = vld [vmem:[#allocation3 + $0x38c] sm:$0xf]
    %v346 = vld [vmem:[#allocation3 + $0x390] sm:$0xff]
    %v347 = vld [vmem:[#allocation3 + $0x398] sm:$0xf]
    %v348 = vld [vmem:[#allocation3 + $0x39c] sm:$0xff]
    %v349 = vld [vmem:[#allocation3 + $0x3a4] sm:$0xf]
    %v350 = vld [vmem:[#allocation3 + $0x3a8] sm:$0xff]
    %v351 = vld [vmem:[#allocation3 + $0x3b0] sm:$0xf]
    %v352 = vld [vmem:[#allocation3 + $0x3b4] sm:$0xff]
    %v353 = vld [vmem:[#allocation3 + $0x3bc] sm:$0xf]
    %v354 = vld [vmem:[%s3] sm:$0x7]
    %v356 = vlaneseq
    %v357 = vshrl.u32 %v356, 7
    %v358 = vsub.s32 0, %v357
    %v359 = vrot.slane %v354, %v358
    %v360 = vlaneseq
    %v361 = vshrl.u32 %v360, 7
    %v362 = vsub.s32 1, %v361
    %v363 = vrot.slane %v354, %v362
    %v364 = vlaneseq
    %v365 = vshrl.u32 %v364, 7
    %v366 = vsub.s32 2, %v365
    %v367 = vrot.slane %v354, %v366
    %v531 = vunpack.c.l.b16 %v194
    %v532 = vunpack.c.h.b16 %v194
    %v533 = vunpack.c.l.b16 %v195
    %v534 = vunpack.c.l.b16 %v196
    %v535 = vunpack.c.h.b16 %v196
    %v536 = vunpack.c.l.b16 %v197
    %v537 = vunpack.c.l.b16 %v198
    %v538 = vunpack.c.h.b16 %v198
    %v539 = vunpack.c.l.b16 %v199
    %v540 = vunpack.c.l.b16 %v200
    %v541 = vunpack.c.h.b16 %v200
    %v542 = vunpack.c.l.b16 %v201
    %v543 = vunpack.c.l.b16 %v202
    %v544 = vunpack.c.h.b16 %v202
    %v545 = vunpack.c.l.b16 %v203
    %v546 = vunpack.c.l.b16 %v204
    %v547 = vunpack.c.h.b16 %v204
    %v548 = vunpack.c.l.b16 %v205
    %v549 = vunpack.c.l.b16 %v206
    %v550 = vunpack.c.h.b16 %v206
    %v551 = vunpack.c.l.b16 %v207
    %v552 = vunpack.c.l.b16 %v208
    %v553 = vunpack.c.h.b16 %v208
    %v554 = vunpack.c.l.b16 %v209
    %v555 = vunpack.c.l.b16 %v210
    %v556 = vunpack.c.h.b16 %v210
    %v557 = vunpack.c.l.b16 %v211
    %v558 = vunpack.c.l.b16 %v212
    %v559 = vunpack.c.h.b16 %v212
    %v560 = vunpack.c.l.b16 %v213
    %v561 = vunpack.c.l.b16 %v214
    %v562 = vunpack.c.h.b16 %v214
    %v563 = vunpack.c.l.b16 %v215
    %v564 = vunpack.c.l.b16 %v216
    %v565 = vunpack.c.h.b16 %v216
    %v566 = vunpack.c.l.b16 %v217
    %v567 = vunpack.c.l.b16 %v218
    %v568 = vunpack.c.h.b16 %v218
    %v569 = vunpack.c.l.b16 %v219
    %v570 = vunpack.c.l.b16 %v220
    %v571 = vunpack.c.h.b16 %v220
    %v572 = vunpack.c.l.b16 %v221
    %v573 = vunpack.c.l.b16 %v222
    %v574 = vunpack.c.h.b16 %v222
    %v575 = vunpack.c.l.b16 %v223
    %v576 = vunpack.c.l.b16 %v224
    %v577 = vunpack.c.h.b16 %v224
    %v578 = vunpack.c.l.b16 %v225
    %v579 = vunpack.c.l.b16 %v226
    %v580 = vunpack.c.h.b16 %v226
    %v581 = vunpack.c.l.b16 %v227
    %v582 = vunpack.c.l.b16 %v228
    %v583 = vunpack.c.h.b16 %v228
    %v584 = vunpack.c.l.b16 %v229
    %v585 = vunpack.c.l.b16 %v230
    %v586 = vunpack.c.h.b16 %v230
    %v587 = vunpack.c.l.b16 %v231
    %v588 = vunpack.c.l.b16 %v232
    %v589 = vunpack.c.h.b16 %v232
    %v590 = vunpack.c.l.b16 %v233
    %v591 = vunpack.c.l.b16 %v234
    %v592 = vunpack.c.h.b16 %v234
    %v593 = vunpack.c.l.b16 %v235
    %v594 = vunpack.c.l.b16 %v236
    %v595 = vunpack.c.h.b16 %v236
    %v596 = vunpack.c.l.b16 %v237
    %v597 = vunpack.c.l.b16 %v238
    %v598 = vunpack.c.h.b16 %v238
    %v599 = vunpack.c.l.b16 %v239
    %v600 = vunpack.c.l.b16 %v240
    %v601 = vunpack.c.h.b16 %v240
    %v602 = vunpack.c.l.b16 %v241
    %v603 = vunpack.c.l.b16 %v242
    %v604 = vunpack.c.h.b16 %v242
    %v605 = vunpack.c.l.b16 %v243
    %v606 = vunpack.c.l.b16 %v244
    %v607 = vunpack.c.h.b16 %v244
    %v608 = vunpack.c.l.b16 %v245
    %v609 = vunpack.c.l.b16 %v246
    %v610 = vunpack.c.h.b16 %v246
    %v611 = vunpack.c.l.b16 %v247
    %v612 = vunpack.c.l.b16 %v248
    %v613 = vunpack.c.h.b16 %v248
    %v614 = vunpack.c.l.b16 %v249
    %v615 = vunpack.c.l.b16 %v250
    %v616 = vunpack.c.h.b16 %v250
    %v617 = vunpack.c.l.b16 %v251
    %v618 = vunpack.c.l.b16 %v252
    %v619 = vunpack.c.h.b16 %v252
    %v620 = vunpack.c.l.b16 %v253
    %v621 = vunpack.c.l.b16 %v254
    %v622 = vunpack.c.h.b16 %v254
    %v623 = vunpack.c.l.b16 %v255
    %v624 = vunpack.c.l.b16 %v256
    %v625 = vunpack.c.h.b16 %v256
    %v626 = vunpack.c.l.b16 %v257
    %v627 = vunpack.c.l.b16 %v258
    %v628 = vunpack.c.h.b16 %v258
    %v629 = vunpack.c.l.b16 %v259
    %v630 = vunpack.c.l.b16 %v260
    %v631 = vunpack.c.h.b16 %v260
    %v632 = vunpack.c.l.b16 %v261
    %v633 = vunpack.c.l.b16 %v262
    %v634 = vunpack.c.h.b16 %v262
    %v635 = vunpack.c.l.b16 %v263
    %v636 = vunpack.c.l.b16 %v264
    %v637 = vunpack.c.h.b16 %v264
    %v638 = vunpack.c.l.b16 %v265
    %v639 = vunpack.c.l.b16 %v266
    %v640 = vunpack.c.h.b16 %v266
    %v641 = vunpack.c.l.b16 %v267
    %v642 = vunpack.c.l.b16 %v268
    %v643 = vunpack.c.h.b16 %v268
    %v644 = vunpack.c.l.b16 %v269
    %v645 = vunpack.c.l.b16 %v270
    %v646 = vunpack.c.h.b16 %v270
    %v647 = vunpack.c.l.b16 %v271
    %v648 = vunpack.c.l.b16 %v272
    %v649 = vunpack.c.h.b16 %v272
    %v650 = vunpack.c.l.b16 %v273
    %v651 = vunpack.c.l.b16 %v274
    %v652 = vunpack.c.h.b16 %v274
    %v653 = vunpack.c.l.b16 %v275
    %v654 = vunpack.c.l.b16 %v276
    %v655 = vunpack.c.h.b16 %v276
    %v656 = vunpack.c.l.b16 %v277
    %v657 = vunpack.c.l.b16 %v278
    %v658 = vunpack.c.h.b16 %v278
    %v659 = vunpack.c.l.b16 %v279
    %v660 = vunpack.c.l.b16 %v280
    %v661 = vunpack.c.h.b16 %v280
    %v662 = vunpack.c.l.b16 %v281
    %v663 = vunpack.c.l.b16 %v282
    %v664 = vunpack.c.h.b16 %v282
    %v665 = vunpack.c.l.b16 %v283
    %v666 = vunpack.c.l.b16 %v284
    %v667 = vunpack.c.h.b16 %v284
    %v668 = vunpack.c.l.b16 %v285
    %v669 = vunpack.c.l.b16 %v286
    %v670 = vunpack.c.h.b16 %v286
    %v671 = vunpack.c.l.b16 %v287
    %v672 = vunpack.c.l.b16 %v288
    %v673 = vunpack.c.h.b16 %v288
    %v674 = vunpack.c.l.b16 %v289
    %v675 = vunpack.c.l.b16 %v290
    %v676 = vunpack.c.h.b16 %v290
    %v677 = vunpack.c.l.b16 %v291
    %v678 = vunpack.c.l.b16 %v292
    %v679 = vunpack.c.h.b16 %v292
    %v680 = vunpack.c.l.b16 %v293
    %v681 = vunpack.c.l.b16 %v294
    %v682 = vunpack.c.h.b16 %v294
    %v683 = vunpack.c.l.b16 %v295
    %v684 = vunpack.c.l.b16 %v296
    %v685 = vunpack.c.h.b16 %v296
    %v686 = vunpack.c.l.b16 %v297
    %v687 = vunpack.c.l.b16 %v298
    %v688 = vunpack.c.h.b16 %v298
    %v689 = vunpack.c.l.b16 %v299
    %v690 = vunpack.c.l.b16 %v300
    %v691 = vunpack.c.h.b16 %v300
    %v692 = vunpack.c.l.b16 %v301
    %v693 = vunpack.c.l.b16 %v302
    %v694 = vunpack.c.h.b16 %v302
    %v695 = vunpack.c.l.b16 %v303
    %v696 = vunpack.c.l.b16 %v304
    %v697 = vunpack.c.h.b16 %v304
    %v698 = vunpack.c.l.b16 %v305
    %v699 = vunpack.c.l.b16 %v306
    %v700 = vunpack.c.h.b16 %v306
    %v701 = vunpack.c.l.b16 %v307
    %v702 = vunpack.c.l.b16 %v308
    %v703 = vunpack.c.h.b16 %v308
    %v704 = vunpack.c.l.b16 %v309
    %v705 = vunpack.c.l.b16 %v310
    %v706 = vunpack.c.h.b16 %v310
    %v707 = vunpack.c.l.b16 %v311
    %v708 = vunpack.c.l.b16 %v312
    %v709 = vunpack.c.h.b16 %v312
    %v710 = vunpack.c.l.b16 %v313
    %v711 = vunpack.c.l.b16 %v314
    %v712 = vunpack.c.h.b16 %v314
    %v713 = vunpack.c.l.b16 %v315
    %v714 = vunpack.c.l.b16 %v316
    %v715 = vunpack.c.h.b16 %v316
    %v716 = vunpack.c.l.b16 %v317
    %v717 = vunpack.c.l.b16 %v318
    %v718 = vunpack.c.h.b16 %v318
    %v719 = vunpack.c.l.b16 %v319
    %v720 = vunpack.c.l.b16 %v320
    %v721 = vunpack.c.h.b16 %v320
    %v722 = vunpack.c.l.b16 %v321
    %v723 = vunpack.c.l.b16 %v322
    %v724 = vunpack.c.h.b16 %v322
    %v725 = vunpack.c.l.b16 %v323
    %v726 = vunpack.c.l.b16 %v324
    %v727 = vunpack.c.h.b16 %v324
    %v728 = vunpack.c.l.b16 %v325
    %v729 = vunpack.c.l.b16 %v326
    %v730 = vunpack.c.h.b16 %v326
    %v731 = vunpack.c.l.b16 %v327
    %v732 = vunpack.c.l.b16 %v328
    %v733 = vunpack.c.h.b16 %v328
    %v734 = vunpack.c.l.b16 %v329
    %v735 = vunpack.c.l.b16 %v330
    %v736 = vunpack.c.h.b16 %v330
    %v737 = vunpack.c.l.b16 %v331
    %v738 = vunpack.c.l.b16 %v332
    %v739 = vunpack.c.h.b16 %v332
    %v740 = vunpack.c.l.b16 %v333
    %v741 = vunpack.c.l.b16 %v334
    %v742 = vunpack.c.h.b16 %v334
    %v743 = vunpack.c.l.b16 %v335
    %v744 = vunpack.c.l.b16 %v336
    %v745 = vunpack.c.h.b16 %v336
    %v746 = vunpack.c.l.b16 %v337
    %v747 = vunpack.c.l.b16 %v338
    %v748 = vunpack.c.h.b16 %v338
    %v749 = vunpack.c.l.b16 %v339
    %v750 = vunpack.c.l.b16 %v340
    %v751 = vunpack.c.h.b16 %v340
    %v752 = vunpack.c.l.b16 %v341
    %v753 = vunpack.c.l.b16 %v342
    %v754 = vunpack.c.h.b16 %v342
    %v755 = vunpack.c.l.b16 %v343
    %v756 = vunpack.c.l.b16 %v344
    %v757 = vunpack.c.h.b16 %v344
    %v758 = vunpack.c.l.b16 %v345
    %v759 = vunpack.c.l.b16 %v346
    %v760 = vunpack.c.h.b16 %v346
    %v761 = vunpack.c.l.b16 %v347
    %v762 = vunpack.c.l.b16 %v348
    %v763 = vunpack.c.h.b16 %v348
    %v764 = vunpack.c.l.b16 %v349
    %v765 = vunpack.c.l.b16 %v350
    %v766 = vunpack.c.h.b16 %v350
    %v767 = vunpack.c.l.b16 %v351
    %v768 = vunpack.c.l.b16 %v352
    %v769 = vunpack.c.h.b16 %v352
    %v770 = vunpack.c.l.b16 %v353
    %v771 = vpack.c.b16 %v534, %v531
    %v772 = vpack.c.b16 %v535, %v532
    %v773 = vpack.c.b16 %v536, %v533
    %v774 = vpack.c.b16 %v540, %v537
    %v775 = vpack.c.b16 %v541, %v538
    %v776 = vpack.c.b16 %v542, %v539
    %v777 = vpack.c.b16 %v546, %v543
    %v778 = vpack.c.b16 %v547, %v544
    %v779 = vpack.c.b16 %v548, %v545
    %v780 = vpack.c.b16 %v552, %v549
    %v781 = vpack.c.b16 %v553, %v550
    %v782 = vpack.c.b16 %v554, %v551
    %v783 = vpack.c.b16 %v558, %v555
    %v784 = vpack.c.b16 %v559, %v556
    %v785 = vpack.c.b16 %v560, %v557
    %v786 = vpack.c.b16 %v564, %v561
    %v787 = vpack.c.b16 %v565, %v562
    %v788 = vpack.c.b16 %v566, %v563
    %v789 = vpack.c.b16 %v570, %v567
    %v790 = vpack.c.b16 %v571, %v568
    %v791 = vpack.c.b16 %v572, %v569
    %v792 = vpack.c.b16 %v576, %v573
    %v793 = vpack.c.b16 %v577, %v574
    %v794 = vpack.c.b16 %v578, %v575
    %v795 = vpack.c.b16 %v582, %v579
    %v796 = vpack.c.b16 %v583, %v580
    %v797 = vpack.c.b16 %v584, %v581
    %v798 = vpack.c.b16 %v588, %v585
    %v799 = vpack.c.b16 %v589, %v586
    %v800 = vpack.c.b16 %v590, %v587
    %v801 = vpack.c.b16 %v594, %v591
    %v802 = vpack.c.b16 %v595, %v592
    %v803 = vpack.c.b16 %v596, %v593
    %v804 = vpack.c.b16 %v600, %v597
    %v805 = vpack.c.b16 %v601, %v598
    %v806 = vpack.c.b16 %v602, %v599
    %v807 = vpack.c.b16 %v606, %v603
    %v808 = vpack.c.b16 %v607, %v604
    %v809 = vpack.c.b16 %v608, %v605
    %v810 = vpack.c.b16 %v612, %v609
    %v811 = vpack.c.b16 %v613, %v610
    %v812 = vpack.c.b16 %v614, %v611
    %v813 = vpack.c.b16 %v618, %v615
    %v814 = vpack.c.b16 %v619, %v616
    %v815 = vpack.c.b16 %v620, %v617
    %v816 = vpack.c.b16 %v624, %v621
    %v817 = vpack.c.b16 %v625, %v622
    %v818 = vpack.c.b16 %v626, %v623
    %v819 = vpack.c.b16 %v630, %v627
    %v820 = vpack.c.b16 %v631, %v628
    %v821 = vpack.c.b16 %v632, %v629
    %v822 = vpack.c.b16 %v636, %v633
    %v823 = vpack.c.b16 %v637, %v634
    %v824 = vpack.c.b16 %v638, %v635
    %v825 = vpack.c.b16 %v642, %v639
    %v826 = vpack.c.b16 %v643, %v640
    %v827 = vpack.c.b16 %v644, %v641
    %v828 = vpack.c.b16 %v648, %v645
    %v829 = vpack.c.b16 %v649, %v646
    %v830 = vpack.c.b16 %v650, %v647
    %v831 = vpack.c.b16 %v654, %v651
    %v832 = vpack.c.b16 %v655, %v652
    %v833 = vpack.c.b16 %v656, %v653
    %v834 = vpack.c.b16 %v660, %v657
    %v835 = vpack.c.b16 %v661, %v658
    %v836 = vpack.c.b16 %v662, %v659
    %v837 = vpack.c.b16 %v666, %v663
    %v838 = vpack.c.b16 %v667, %v664
    %v839 = vpack.c.b16 %v668, %v665
    %v840 = vpack.c.b16 %v672, %v669
    %v841 = vpack.c.b16 %v673, %v670
    %v842 = vpack.c.b16 %v674, %v671
    %v843 = vpack.c.b16 %v678, %v675
    %v844 = vpack.c.b16 %v679, %v676
    %v845 = vpack.c.b16 %v680, %v677
    %v846 = vpack.c.b16 %v684, %v681
    %v847 = vpack.c.b16 %v685, %v682
    %v848 = vpack.c.b16 %v686, %v683
    %v849 = vpack.c.b16 %v690, %v687
    %v850 = vpack.c.b16 %v691, %v688
    %v851 = vpack.c.b16 %v692, %v689
    %v852 = vpack.c.b16 %v696, %v693
    %v853 = vpack.c.b16 %v697, %v694
    %v854 = vpack.c.b16 %v698, %v695
    %v855 = vpack.c.b16 %v702, %v699
    %v856 = vpack.c.b16 %v703, %v700
    %v857 = vpack.c.b16 %v704, %v701
    %v858 = vpack.c.b16 %v708, %v705
    %v859 = vpack.c.b16 %v709, %v706
    %v860 = vpack.c.b16 %v710, %v707
    %v861 = vpack.c.b16 %v714, %v711
    %v862 = vpack.c.b16 %v715, %v712
    %v863 = vpack.c.b16 %v716, %v713
    %v864 = vpack.c.b16 %v720, %v717
    %v865 = vpack.c.b16 %v721, %v718
    %v866 = vpack.c.b16 %v722, %v719
    %v867 = vpack.c.b16 %v726, %v723
    %v868 = vpack.c.b16 %v727, %v724
    %v869 = vpack.c.b16 %v728, %v725
    %v870 = vpack.c.b16 %v732, %v729
    %v871 = vpack.c.b16 %v733, %v730
    %v872 = vpack.c.b16 %v734, %v731
    %v873 = vpack.c.b16 %v738, %v735
    %v874 = vpack.c.b16 %v739, %v736
    %v875 = vpack.c.b16 %v740, %v737
    %v876 = vpack.c.b16 %v744, %v741
    %v877 = vpack.c.b16 %v745, %v742
    %v878 = vpack.c.b16 %v746, %v743
    %v879 = vpack.c.b16 %v750, %v747
    %v880 = vpack.c.b16 %v751, %v748
    %v881 = vpack.c.b16 %v752, %v749
    %v882 = vpack.c.b16 %v756, %v753
    %v883 = vpack.c.b16 %v757, %v754
    %v884 = vpack.c.b16 %v758, %v755
    %v885 = vpack.c.b16 %v762, %v759
    %v886 = vpack.c.b16 %v763, %v760
    %v887 = vpack.c.b16 %v764, %v761
    %v888 = vpack.c.b16 %v768, %v765
    %v889 = vpack.c.b16 %v769, %v766
    %v890 = vpack.c.b16 %v770, %v767
    %1011 = vmatprep.subr.bf16.mxu0 %v793
    %1012 = vmatpush1.bf16.msra.mxu0 %v792
    %1013 = vmatprep.subr.bf16.mxu0 %v790
    %1014 = vmatpush1.bf16.msra.mxu0 %v789
    %1015 = vmatprep.subr.bf16.mxu0 %v787
    %1016 = vmatpush1.bf16.msra.mxu0 %v786
    %1017 = vmatprep.subr.bf16.mxu0 %v784
    %1018 = vmatpush1.bf16.msra.mxu0 %v783
    %1019 = vmatprep.subr.bf16.mxu0 %v781
    %1020 = vmatpush1.bf16.msra.mxu0 %v780
    %1021 = vmatprep.subr.bf16.mxu0 %v778
    %1022 = vmatpush1.bf16.msra.mxu0 %v777
    %1023 = vmatprep.subr.bf16.mxu0 %v775
    %1024 = vmatpush1.bf16.msra.mxu0 %v774
    %1025 = vmatprep.subr.bf16.mxu0 %v772
    %1026 = vmatpush1.bf16.msra.mxu0 %v771
    %1027 = vmatprep.subr.bf16.mxu0 %v817
    %1028 = vmatpush2.bf16.msra.mxu0 %v816
    %1029 = vmatprep.subr.bf16.mxu0 %v814
    %1030 = vmatpush2.bf16.msra.mxu0 %v813
    %1031 = vmatprep.subr.bf16.mxu0 %v811
    %1032 = vmatpush2.bf16.msra.mxu0 %v810
    %1033 = vmatprep.subr.bf16.mxu0 %v808
    %1034 = vmatpush2.bf16.msra.mxu0 %v807
    %1035 = vmatprep.subr.bf16.mxu0 %v805
    %1036 = vmatpush2.bf16.msra.mxu0 %v804
    %1037 = vmatprep.subr.bf16.mxu0 %v802
    %1038 = vmatpush2.bf16.msra.mxu0 %v801
    %1039 = vmatprep.subr.bf16.mxu0 %v799
    %1040 = vmatpush2.bf16.msra.mxu0 %v798
    %1041 = vmatprep.subr.bf16.mxu0 %v796
    %1042 = vmatpush2.bf16.msra.mxu0 %v795
    %1043 = vmatprep.mubr.bf16.mxu0 %v190
    %1044 = vmatmul.mubr.bf16.gmra.mxu0 %v189
    %v1045 = vpop.f32.mrf.mxu0
    %v1046 = vadd.f32 %v359, %v1045
    %v1047 = vpop.f32.mrf.mxu0
    %v1048 = vadd.f32 %v363, %v1047
    %v1049 = vpop.f32.mrf.mxu0
    %v1050 = vadd.f32 %v359, %v1049
    %v1051 = vpop.f32.mrf.mxu0
    %v1052 = vadd.f32 %v363, %v1051
    %1053 = vdwg.mxu0
    %1054 = vmatprep.subr.bf16.mxu0 %v841
    %1055 = vmatpush1.bf16.msra.mxu0 %v840
    %1056 = vmatprep.subr.bf16.mxu0 %v838
    %1057 = vmatpush1.bf16.msra.mxu0 %v837
    %1058 = vmatprep.subr.bf16.mxu0 %v835
    %1059 = vmatpush1.bf16.msra.mxu0 %v834
    %1060 = vmatprep.subr.bf16.mxu0 %v832
    %1061 = vmatpush1.bf16.msra.mxu0 %v831
    %1062 = vmatprep.subr.bf16.mxu0 %v829
    %1063 = vmatpush1.bf16.msra.mxu0 %v828
    %1064 = vmatprep.subr.bf16.mxu0 %v826
    %1065 = vmatpush1.bf16.msra.mxu0 %v825
    %1066 = vmatprep.subr.bf16.mxu0 %v823
    %1067 = vmatpush1.bf16.msra.mxu0 %v822
    %1068 = vmatprep.subr.bf16.mxu0 %v820
    %1069 = vmatpush1.bf16.msra.mxu0 %v819
    %1070 = vmatprep.subr.bf16.mxu0 %v865
    %1071 = vmatpush2.bf16.msra.mxu0 %v864
    %1072 = vmatprep.subr.bf16.mxu0 %v862
    %1073 = vmatpush2.bf16.msra.mxu0 %v861
    %1074 = vmatprep.subr.bf16.mxu0 %v859
    %1075 = vmatpush2.bf16.msra.mxu0 %v858
    %1076 = vmatprep.subr.bf16.mxu0 %v856
    %1077 = vmatpush2.bf16.msra.mxu0 %v855
    %1078 = vmatprep.subr.bf16.mxu0 %v853
    %1079 = vmatpush2.bf16.msra.mxu0 %v852
    %1080 = vmatprep.subr.bf16.mxu0 %v850
    %1081 = vmatpush2.bf16.msra.mxu0 %v849
    %1082 = vmatprep.subr.bf16.mxu0 %v847
    %1083 = vmatpush2.bf16.msra.mxu0 %v846
    %1084 = vmatprep.subr.bf16.mxu0 %v844
    %1085 = vmatpush2.bf16.msra.mxu0 %v843
    %1086 = vmatprep.mubr.bf16.mxu0 %v192
    %1087 = vmatmul.mubr.bf16.gmra.mxu0 %v191
    %v1088 = vpop.f32.mrf.mxu0
    %v1089 = vadd.f32 %v1046, %v1088
    %v1090 = vpop.f32.mrf.mxu0
    %v1091 = vadd.f32 %v1048, %v1090
    %v1092 = vpop.f32.mrf.mxu0
    %v1093 = vadd.f32 %v1050, %v1092
    %v1094 = vpop.f32.mrf.mxu0
    %v1095 = vadd.f32 %v1052, %v1094
    %1096 = vdwg.mxu0
    %1097 = vmatprep.subr.bf16.mxu0 %v889
    %1098 = vmatpush1.bf16.msra.mxu0 %v888
    %1099 = vmatprep.subr.bf16.mxu0 %v886
    %1100 = vmatpush1.bf16.msra.mxu0 %v885
    %1101 = vmatprep.subr.bf16.mxu0 %v883
    %1102 = vmatpush1.bf16.msra.mxu0 %v882
    %1103 = vmatprep.subr.bf16.mxu0 %v880
    %1104 = vmatpush1.bf16.msra.mxu0 %v879
    %1105 = vmatprep.subr.bf16.mxu0 %v877
    %1106 = vmatpush1.bf16.msra.mxu0 %v876
    %1107 = vmatprep.subr.bf16.mxu0 %v874
    %1108 = vmatpush1.bf16.msra.mxu0 %v873
    %1109 = vmatprep.subr.bf16.mxu0 %v871
    %1110 = vmatpush1.bf16.msra.mxu0 %v870
    %1111 = vmatprep.subr.bf16.mxu0 %v868
    %1112 = vmatpush1.bf16.msra.mxu0 %v867
    %1113 = vmatprep.subr.bf16.mxu0 0
    %1114 = vmatpush2.bf16.msra.mxu0 0
    %1115 = vmatprep.subr.bf16.mxu0 0
    %1116 = vmatpush2.bf16.msra.mxu0 0
    %1117 = vmatprep.subr.bf16.mxu0 0
    %1118 = vmatpush2.bf16.msra.mxu0 0
    %1119 = vmatprep.subr.bf16.mxu0 0
    %1120 = vmatpush2.bf16.msra.mxu0 0
    %1121 = vmatprep.subr.bf16.mxu0 0
    %1122 = vmatpush2.bf16.msra.mxu0 0
    %1123 = vmatprep.subr.bf16.mxu0 0
    %1124 = vmatpush2.bf16.msra.mxu0 0
    %1125 = vmatprep.subr.bf16.mxu0 0
    %1126 = vmatpush2.bf16.msra.mxu0 0
    %1127 = vmatprep.subr.bf16.mxu0 0
    %1128 = vmatpush2.bf16.msra.mxu0 0
    %1129 = vmatprep.mubr.bf16.mxu0 0
    %1130 = vmatmul.mubr.bf16.gmra.mxu0 %v193
    %v1131 = vpop.f32.mrf.mxu0
    %v1132 = vadd.f32 %v1089, %v1131
    %v1133 = vpop.f32.mrf.mxu0
    %v1134 = vadd.f32 %v1091, %v1133
    %v1135 = vpop.f32.mrf.mxu0
    %v1136 = vadd.f32 %v1093, %v1135
    %v1137 = vpop.f32.mrf.mxu0
    %v1138 = vadd.f32 %v1095, %v1137
    %1139 = vdwg.mxu0
    %1140 = vmatprep.subr.bf16.mxu0 0
    %1141 = vmatpush1.bf16.msra.mxu0 %v794
    %1142 = vmatprep.subr.bf16.mxu0 0
    %1143 = vmatpush1.bf16.msra.mxu0 %v791
    %1144 = vmatprep.subr.bf16.mxu0 0
    %1145 = vmatpush1.bf16.msra.mxu0 %v788
    %1146 = vmatprep.subr.bf16.mxu0 0
    %1147 = vmatpush1.bf16.msra.mxu0 %v785
    %1148 = vmatprep.subr.bf16.mxu0 0
    %1149 = vmatpush1.bf16.msra.mxu0 %v782
    %1150 = vmatprep.subr.bf16.mxu0 0
    %1151 = vmatpush1.bf16.msra.mxu0 %v779
    %1152 = vmatprep.subr.bf16.mxu0 0
    %1153 = vmatpush1.bf16.msra.mxu0 %v776
    %1154 = vmatprep.subr.bf16.mxu0 0
    %1155 = vmatpush1.bf16.msra.mxu0 %v773
    %1156 = vmatprep.subr.bf16.mxu0 0
    %1157 = vmatpush2.bf16.msra.mxu0 %v818
    %1158 = vmatprep.subr.bf16.mxu0 0
    %1159 = vmatpush2.bf16.msra.mxu0 %v815
    %1160 = vmatprep.subr.bf16.mxu0 0
    %1161 = vmatpush2.bf16.msra.mxu0 %v812
    %1162 = vmatprep.subr.bf16.mxu0 0
    %1163 = vmatpush2.bf16.msra.mxu0 %v809
    %1164 = vmatprep.subr.bf16.mxu0 0
    %1165 = vmatpush2.bf16.msra.mxu0 %v806
    %1166 = vmatprep.subr.bf16.mxu0 0
    %1167 = vmatpush2.bf16.msra.mxu0 %v803
    %1168 = vmatprep.subr.bf16.mxu0 0
    %1169 = vmatpush2.bf16.msra.mxu0 %v800
    %1170 = vmatprep.subr.bf16.mxu0 0
    %1171 = vmatpush2.bf16.msra.mxu0 %v797
    %1172 = vmatprep.mubr.bf16.mxu0 %v190
    %1173 = vmatmul.mubr.bf16.gmra.mxu0 %v189
    %v1174 = vpop.f32.mrf.mxu0
    %v1175 = vadd.f32 %v367, %v1174
    %v1176 = vpop.f32.mrf.mxu0
    %v1177 = vpop.f32.mrf.mxu0
    %v1178 = vadd.f32 %v367, %v1177
    %v1179 = vpop.f32.mrf.mxu0
    %1180 = vdwg.mxu0
    %1181 = vmatprep.subr.bf16.mxu0 0
    %1182 = vmatpush1.bf16.msra.mxu0 %v842
    %1183 = vmatprep.subr.bf16.mxu0 0
    %1184 = vmatpush1.bf16.msra.mxu0 %v839
    %1185 = vmatprep.subr.bf16.mxu0 0
    %1186 = vmatpush1.bf16.msra.mxu0 %v836
    %1187 = vmatprep.subr.bf16.mxu0 0
    %1188 = vmatpush1.bf16.msra.mxu0 %v833
    %1189 = vmatprep.subr.bf16.mxu0 0
    %1190 = vmatpush1.bf16.msra.mxu0 %v830
    %1191 = vmatprep.subr.bf16.mxu0 0
    %1192 = vmatpush1.bf16.msra.mxu0 %v827
    %1193 = vmatprep.subr.bf16.mxu0 0
    %1194 = vmatpush1.bf16.msra.mxu0 %v824
    %1195 = vmatprep.subr.bf16.mxu0 0
    %1196 = vmatpush1.bf16.msra.mxu0 %v821
    %1197 = vmatprep.subr.bf16.mxu0 0
    %1198 = vmatpush2.bf16.msra.mxu0 %v866
    %1199 = vmatprep.subr.bf16.mxu0 0
    %1200 = vmatpush2.bf16.msra.mxu0 %v863
    %1201 = vmatprep.subr.bf16.mxu0 0
    %1202 = vmatpush2.bf16.msra.mxu0 %v860
    %1203 = vmatprep.subr.bf16.mxu0 0
    %1204 = vmatpush2.bf16.msra.mxu0 %v857
    %1205 = vmatprep.subr.bf16.mxu0 0
    %1206 = vmatpush2.bf16.msra.mxu0 %v854
    %1207 = vmatprep.subr.bf16.mxu0 0
    %1208 = vmatpush2.bf16.msra.mxu0 %v851
    %1209 = vmatprep.subr.bf16.mxu0 0
    %1210 = vmatpush2.bf16.msra.mxu0 %v848
    %1211 = vmatprep.subr.bf16.mxu0 0
    %1212 = vmatpush2.bf16.msra.mxu0 %v845
    %1213 = vmatprep.mubr.bf16.mxu0 %v192
    %1214 = vmatmul.mubr.bf16.gmra.mxu0 %v191
    %v1215 = vpop.f32.mrf.mxu0
    %v1216 = vadd.f32 %v1175, %v1215
    %v1217 = vpop.f32.mrf.mxu0
    %v1218 = vpop.f32.mrf.mxu0
    %v1219 = vadd.f32 %v1178, %v1218
    %v1220 = vpop.f32.mrf.mxu0
    %1221 = vdwg.mxu0
    %1222 = vmatprep.subr.bf16.mxu0 0
    %1223 = vmatpush1.bf16.msra.mxu0 %v890
    %1224 = vmatprep.subr.bf16.mxu0 0
    %1225 = vmatpush1.bf16.msra.mxu0 %v887
    %1226 = vmatprep.subr.bf16.mxu0 0
    %1227 = vmatpush1.bf16.msra.mxu0 %v884
    %1228 = vmatprep.subr.bf16.mxu0 0
    %1229 = vmatpush1.bf16.msra.mxu0 %v881
    %1230 = vmatprep.subr.bf16.mxu0 0
    %1231 = vmatpush1.bf16.msra.mxu0 %v878
    %1232 = vmatprep.subr.bf16.mxu0 0
    %1233 = vmatpush1.bf16.msra.mxu0 %v875
    %1234 = vmatprep.subr.bf16.mxu0 0
    %1235 = vmatpush1.bf16.msra.mxu0 %v872
    %1236 = vmatprep.subr.bf16.mxu0 0
    %1237 = vmatpush1.bf16.msra.mxu0 %v869
    %1238 = vmatprep.subr.bf16.mxu0 0
    %1239 = vmatpush2.bf16.msra.mxu0 0
    %1240 = vmatprep.subr.bf16.mxu0 0
    %1241 = vmatpush2.bf16.msra.mxu0 0
    %1242 = vmatprep.subr.bf16.mxu0 0
    %1243 = vmatpush2.bf16.msra.mxu0 0
    %1244 = vmatprep.subr.bf16.mxu0 0
    %1245 = vmatpush2.bf16.msra.mxu0 0
    %1246 = vmatprep.subr.bf16.mxu0 0
    %1247 = vmatpush2.bf16.msra.mxu0 0
    %1248 = vmatprep.subr.bf16.mxu0 0
    %1249 = vmatpush2.bf16.msra.mxu0 0
    %1250 = vmatprep.subr.bf16.mxu0 0
    %1251 = vmatpush2.bf16.msra.mxu0 0
    %1252 = vmatprep.subr.bf16.mxu0 0
    %1253 = vmatpush2.bf16.msra.mxu0 0
    %1254 = vmatprep.mubr.bf16.mxu0 0
    %1255 = vmatmul.mubr.bf16.gmra.mxu0 %v193
    %v1256 = vpop.f32.mrf.mxu0
    %v1257 = vadd.f32 %v1216, %v1256
    %v1258 = vpop.f32.mrf.mxu0
    %v1259 = vpop.f32.mrf.mxu0
    %v1260 = vadd.f32 %v1219, %v1259
    %v1261 = vpop.f32.mrf.mxu0
    %1262 = vdwg.mxu0
    %v1263 = vmax.f32 %v1132, 0.0
    %v1264 = vmax.f32 %v1134, 0.0
    %v1265 = vmax.f32 %v1257, 0.0
    %v1266 = vmax.f32 %v1136, 0.0
    %v1267 = vmax.f32 %v1138, 0.0
    %v1268 = vmax.f32 %v1260, 0.0
    %v1269 = vrot.slane %v1263, 4
    %v1270 = vmax.f32 %v1263, %v1269
    %v1271 = vrot.slane %v1270, 2
    %v1272 = vmax.f32 %v1270, %v1271
    %v1273 = vrot.slane %v1272, 1
    %v1274 = vmax.f32 %v1272, %v1273
    %v1275 = vrot.slane %v1264, 4
    %v1276 = vmax.f32 %v1264, %v1275
    %v1277 = vrot.slane %v1276, 2
    %v1278 = vmax.f32 %v1276, %v1277
    %v1279 = vrot.slane %v1278, 1
    %v1280 = vmax.f32 %v1278, %v1279
    %v1281 = vrot.slane %v1265, 4
    %v1282 = vmax.f32 %v1265, %v1281
    %v1283 = vrot.slane %v1282, 2
    %v1284 = vmax.f32 %v1282, %v1283
    %v1285 = vrot.slane %v1284, 1
    %v1286 = vmax.f32 %v1284, %v1285
    %v1287 = vrot.slane %v1266, 4
    %v1288 = vmax.f32 %v1266, %v1287
    %v1289 = vrot.slane %v1288, 2
    %v1290 = vmax.f32 %v1288, %v1289
    %v1291 = vrot.slane %v1290, 1
    %v1292 = vmax.f32 %v1290, %v1291
    %v1293 = vrot.slane %v1267, 4
    %v1294 = vmax.f32 %v1267, %v1293
    %v1295 = vrot.slane %v1294, 2
    %v1296 = vmax.f32 %v1294, %v1295
    %v1297 = vrot.slane %v1296, 1
    %v1298 = vmax.f32 %v1296, %v1297
    %v1299 = vrot.slane %v1268, 4
    %v1300 = vmax.f32 %v1268, %v1299
    %v1301 = vrot.slane %v1300, 2
    %v1302 = vmax.f32 %v1300, %v1301
    %v1303 = vrot.slane %v1302, 1
    %v1304 = vmax.f32 %v1302, %v1303
    %v1305 = vadd.f32 %v1274, %v1280
    %v1306 = vadd.f32 %v1292, %v1298
    %v1307 = vadd.f32 %v1305, %v1286
    %v1308 = vadd.f32 %v1306, %v1304
    %v1309 = vpack.c.bf16 %v1307, %v1307
    %v1310 = vpack.c.bf16 %v1308, %v1308
    %v1311 = vld [vmem:[%s4] sm:$0xf]
    %v1312 = vld [vmem:[%s4 + $0x4] sm:$0xf]
    %v1313 = vld [vmem:[%s4 + $0x8] sm:$0xf]
    %v1314 = vld [vmem:[%s4 + $0xc] sm:$0xf]
    %v1315 = vld [vmem:[%s4 + $0x10] sm:$0xf]
    %v1316 = vld [vmem:[%s4 + $0x14] sm:$0xf]
    %v1317 = vld [vmem:[%s4 + $0x18] sm:$0xf]
    %v1318 = vld [vmem:[%s4 + $0x1c] sm:$0xf]
    %v1319 = vld [vmem:[%s4 + $0x20] sm:$0xf]
    %v1320 = vld [vmem:[%s4 + $0x24] sm:$0xf]
    %v1321 = vld [vmem:[%s4 + $0x28] sm:$0xf]
    %v1322 = vld [vmem:[%s4 + $0x2c] sm:$0xf]
    %v1323 = vld [vmem:[%s4 + $0x30] sm:$0xf]
    %v1324 = vld [vmem:[%s4 + $0x34] sm:$0xf]
    %v1325 = vld [vmem:[%s4 + $0x38] sm:$0xf]
    %v1326 = vld [vmem:[%s4 + $0x3c] sm:$0xf]
    %v1327 = vld [vmem:[%s5] sm:$0x1]
    %v1329 = vlaneseq
    %v1330 = vshrl.u32 %v1329, 7
    %v1331 = vsub.s32 0, %v1330
    %v1332 = vrot.slane %v1327, %v1331
    %v1336 = vunpack.c.l.b16 %v1309
    %v1337 = vunpack.c.l.b16 %v1310
    %vm1338 = vcmask 1041409
    %v1339 = vsel %vm1338, %v1337, %v1336
    %v1340 = vpack.c.b16 %v1339, %v1339
    %v1358 = vunpack.c.l.b16 %v1311
    %v1359 = vunpack.c.l.b16 %v1312
    %v1360 = vunpack.c.l.b16 %v1313
    %v1361 = vunpack.c.l.b16 %v1314
    %v1362 = vunpack.c.l.b16 %v1315
    %v1363 = vunpack.c.l.b16 %v1316
    %v1364 = vunpack.c.l.b16 %v1317
    %v1365 = vunpack.c.l.b16 %v1318
    %v1366 = vunpack.c.l.b16 %v1319
    %v1367 = vunpack.c.l.b16 %v1320
    %v1368 = vunpack.c.l.b16 %v1321
    %v1369 = vunpack.c.l.b16 %v1322
    %v1370 = vunpack.c.l.b16 %v1323
    %v1371 = vunpack.c.l.b16 %v1324
    %v1372 = vunpack.c.l.b16 %v1325
    %v1373 = vunpack.c.l.b16 %v1326
    %v1374 = vpack.c.b16 %v1359, %v1358
    %v1375 = vpack.c.b16 %v1361, %v1360
    %v1376 = vpack.c.b16 %v1363, %v1362
    %v1377 = vpack.c.b16 %v1365, %v1364
    %v1378 = vpack.c.b16 %v1367, %v1366
    %v1379 = vpack.c.b16 %v1369, %v1368
    %v1380 = vpack.c.b16 %v1371, %v1370
    %v1381 = vpack.c.b16 %v1373, %v1372
    %1390 = vmatprep.subr.bf16.mxu0 0
    %1391 = vmatpush1.bf16.msra.mxu0 %v1381
    %1392 = vmatprep.subr.bf16.mxu0 0
    %1393 = vmatpush1.bf16.msra.mxu0 %v1380
    %1394 = vmatprep.subr.bf16.mxu0 0
    %1395 = vmatpush1.bf16.msra.mxu0 %v1379
    %1396 = vmatprep.subr.bf16.mxu0 0
    %1397 = vmatpush1.bf16.msra.mxu0 %v1378
    %1398 = vmatprep.subr.bf16.mxu0 0
    %1399 = vmatpush1.bf16.msra.mxu0 %v1377
    %1400 = vmatprep.subr.bf16.mxu0 0
    %1401 = vmatpush1.bf16.msra.mxu0 %v1376
    %1402 = vmatprep.subr.bf16.mxu0 0
    %1403 = vmatpush1.bf16.msra.mxu0 %v1375
    %1404 = vmatprep.subr.bf16.mxu0 0
    %1405 = vmatpush1.bf16.msra.mxu0 %v1374
    %1406 = vmatprep.subr.bf16.mxu0 0
    %1407 = vmatpush2.bf16.msra.mxu0 0
    %1408 = vmatprep.subr.bf16.mxu0 0
    %1409 = vmatpush2.bf16.msra.mxu0 0
    %1410 = vmatprep.subr.bf16.mxu0 0
    %1411 = vmatpush2.bf16.msra.mxu0 0
    %1412 = vmatprep.subr.bf16.mxu0 0
    %1413 = vmatpush2.bf16.msra.mxu0 0
    %1414 = vmatprep.subr.bf16.mxu0 0
    %1415 = vmatpush2.bf16.msra.mxu0 0
    %1416 = vmatprep.subr.bf16.mxu0 0
    %1417 = vmatpush2.bf16.msra.mxu0 0
    %1418 = vmatprep.subr.bf16.mxu0 0
    %1419 = vmatpush2.bf16.msra.mxu0 0
    %1420 = vmatprep.subr.bf16.mxu0 0
    %1421 = vmatpush2.bf16.msra.mxu0 0
    %1422 = vmatprep.mubr.bf16.mxu0 0
    %1423 = vmatmul.mubr.bf16.gmra.mxu0 %v1340
    %v1424 = vpop.f32.mrf.mxu0
    %v1425 = vadd.f32 %v1332, %v1424
    %v1426 = vpop.f32.mrf.mxu0
    %v1427 = vpop.f32.mrf.mxu0
    %v1428 = vpop.f32.mrf.mxu0
    %1429 = vdwg.mxu0
    %vm1430 = vcmp.gt.f32.partialorder %v1425, 0.0
    %v1431 = vmul.f32 %v1425, 0.01
    %v1432 = vsel %vm1430, %v1425, %v1431
    %v1433 = vpack.c.bf16 %v1432, %v1432
    %v1434 = vld [vmem:[%s6] sm:$0xf]
    %v1435 = vld [vmem:[%s6 + $0x4] sm:$0xf]
    %v1436 = vld [vmem:[%s6 + $0x8] sm:$0xf]
    %v1437 = vld [vmem:[%s6 + $0xc] sm:$0xf]
    %v1438 = vld [vmem:[%s6 + $0x10] sm:$0xf]
    %v1439 = vld [vmem:[%s6 + $0x14] sm:$0xf]
    %v1440 = vld [vmem:[%s6 + $0x18] sm:$0xf]
    %v1441 = vld [vmem:[%s6 + $0x1c] sm:$0xf]
    %v1442 = vld [vmem:[%s7] sm:$0x1]
    %v1444 = vlaneseq
    %v1445 = vshrl.u32 %v1444, 7
    %v1446 = vsub.s32 0, %v1445
    %v1447 = vrot.slane %v1442, %v1446
    %v1457 = vunpack.c.l.b16 %v1434
    %v1458 = vunpack.c.l.b16 %v1435
    %v1459 = vunpack.c.l.b16 %v1436
    %v1460 = vunpack.c.l.b16 %v1437
    %v1461 = vunpack.c.l.b16 %v1438
    %v1462 = vunpack.c.l.b16 %v1439
    %v1463 = vunpack.c.l.b16 %v1440
    %v1464 = vunpack.c.l.b16 %v1441
    %v1465 = vpack.c.b16 %v1458, %v1457
    %v1466 = vpack.c.b16 %v1460, %v1459
    %v1467 = vpack.c.b16 %v1462, %v1461
    %v1468 = vpack.c.b16 %v1464, %v1463
    %v1474 = vsel %vm96, %v1433, 0
    %1476 = vmatprep.subr.bf16.mxu0 0
    %1477 = vmatpush1.bf16.msra.mxu0 0
    %1478 = vmatprep.subr.bf16.mxu0 0
    %1479 = vmatpush1.bf16.msra.mxu0 0
    %1480 = vmatprep.subr.bf16.mxu0 0
    %1481 = vmatpush1.bf16.msra.mxu0 0
    %1482 = vmatprep.subr.bf16.mxu0 0
    %1483 = vmatpush1.bf16.msra.mxu0 0
    %1484 = vmatprep.subr.bf16.mxu0 0
    %1485 = vmatpush1.bf16.msra.mxu0 %v1468
    %1486 = vmatprep.subr.bf16.mxu0 0
    %1487 = vmatpush1.bf16.msra.mxu0 %v1467
    %1488 = vmatprep.subr.bf16.mxu0 0
    %1489 = vmatpush1.bf16.msra.mxu0 %v1466
    %1490 = vmatprep.subr.bf16.mxu0 0
    %1491 = vmatpush1.bf16.msra.mxu0 %v1465
    %1492 = vmatprep.subr.bf16.mxu0 0
    %1493 = vmatpush2.bf16.msra.mxu0 0
    %1494 = vmatprep.subr.bf16.mxu0 0
    %1495 = vmatpush2.bf16.msra.mxu0 0
    %1496 = vmatprep.subr.bf16.mxu0 0
    %1497 = vmatpush2.bf16.msra.mxu0 0
    %1498 = vmatprep.subr.bf16.mxu0 0
    %1499 = vmatpush2.bf16.msra.mxu0 0
    %1500 = vmatprep.subr.bf16.mxu0 0
    %1501 = vmatpush2.bf16.msra.mxu0 0
    %1502 = vmatprep.subr.bf16.mxu0 0
    %1503 = vmatpush2.bf16.msra.mxu0 0
    %1504 = vmatprep.subr.bf16.mxu0 0
    %1505 = vmatpush2.bf16.msra.mxu0 0
    %1506 = vmatprep.subr.bf16.mxu0 0
    %1507 = vmatpush2.bf16.msra.mxu0 0
    %1508 = vmatprep.mubr.bf16.mxu0 0
    %1509 = vmatmul.mubr.bf16.gmra.mxu0 %v1474
    %v1510 = vpop.f32.mrf.mxu0
    %v1511 = vadd.f32 %v1447, %v1510
    %v1512 = vpop.f32.mrf.mxu0
    %v1513 = vpop.f32.mrf.mxu0
    %v1514 = vpop.f32.mrf.mxu0
    %1515 = vdwg.mxu0
    %vm1516 = vcmask 17408
    %v1517 = vsel %vm1516, %v1511, -inf
    %1518 = vmax.xlane.f32.xlu0 %v1517
    %v1519 = vpop.xlane.xlu0 %1518
    %v1520 = vsub.f32 %v1511, %v1519
    %v1521 = vmul.f32 %v1520, 1.442695
    %v1522 = vpow.pop %v1521
    %v1523 = vsel %vm1516, %v1522, 0.0
    %1524 = vadd.xlane.f32.xlu0 %v1523
    %v1525 = vpop.xlane.xlu0 %1524
    %v1526 = vrcp.pop %v1525
    %v1527 = vmul.f32 %v1522, %v1526
    %v1528 = vsel %vm1516, %v1527, -inf
    %1529 = vmax.xlane.f32.xlu0 %v1528
    %v1530 = vpop.xlane.xlu0 %1529
    %vm1531 = vcmp.ge.f32.partialorder %v1527, %v1530
    %v1532 = vsel %vm1531, %v50, 3
    %v1533 = vsel %vm1516, %v1532, 2147483647
    %v1534 = vand.u32 %v1533, 65535
    %v1535 = vshra.s32 %v1533, 16
    %v1536 = vcvt.s32.f32 %v1534
    %v1537 = vcvt.s32.f32 %v1535
    %1538 = vmin.xlane.f32.xlu0 %v1537
    %v1539 = vpop.xlane.xlu0 %1538
    %vm1540 = vcmp.eq.f32.partialorder %v1537, %v1539
    %v1541 = vsel %vm1540, %v1536, inf
    %1542 = vmin.xlane.f32.xlu0 %v1541
    %v1543 = vpop.xlane.xlu0 %1542
    %v1544 = vcvt.f32.s32 %v1543
    %v1545 = vcvt.f32.s32 %v1539
    %v1546 = vshll.u32 %v1545, 16
    %v1547 = vadd.s32 %v1546, %v1544
    %1548 = vst.msk [vmem:[%s8] sm:$0x3] %vm1516, %v1511
    %vm1549 = vcmask 1024
    %1550 = vst.msk [vmem:[%s9] sm:$0x3] %vm1549, %v1530
    %1551 = vst.msk [vmem:[%s10] sm:$0x3] %vm1549, %v1547
    // Predicated region
    $region38: #{dummy_model_forward.1} parent=1 // pred_check
      _
    $region39: #{dummy_model_forward.1} parent=1 // pred_check_branch
      %1553 = sbr.rel (0) target = $region41
    $region40: #{dummy_model_forward.1} parent=1 // pred_region
      _
    $region41: #{dummy_model_forward.1} parent=1 // pred_fallthru
      _
    // Predicated region
    $region42: #{dummy_model_forward.1} parent=1 // pred_check
      _
    $region43: #{dummy_model_forward.1} parent=1 // pred_check_branch
      %1555 = sbr.rel (0) target = $region45
    $region44: #{dummy_model_forward.1} parent=1 // pred_region
      _
    $region45: #{dummy_model_forward.1} parent=1 // pred_fallthru
      _
    // Predicated region
    $region46: #{dummy_model_forward.1} parent=1 // pred_check
      _
    $region47: #{dummy_model_forward.1} parent=1 // pred_check_branch
      %1557 = sbr.rel (0) target = $region49
    $region48: #{dummy_model_forward.1} parent=1 // pred_region
      _
    $region49: #{dummy_model_forward.1} parent=1 // pred_fallthru
      _
    // Predicated region
    $region50: #{dummy_model_forward.1} parent=1 // pred_check
      _
    $region51: #{dummy_model_forward.1} parent=1 // pred_check_branch
      %1559 = sbr.rel (0) target = $region53
    $region52: #{dummy_model_forward.1} parent=1 // pred_region
      _
    $region53: #{dummy_model_forward.1} parent=1 // pred_fallthru
      _
    // Predicated region
    $region54: #{dummy_model_forward.1} parent=1 // pred_check
      _
    $region55: #{dummy_model_forward.1} parent=1 // pred_check_branch
      %1561 = sbr.rel (0) target = $region57
    $region56: #{dummy_model_forward.1} parent=1 // pred_region
      _
    $region57: #{dummy_model_forward.1} parent=1 // pred_fallthru
      _
    // Predicated region
    $region58: #{dummy_model_forward.1} parent=1 // pred_check
      _
    $region59: #{dummy_model_forward.1} parent=1 // pred_check_branch
      %1563 = sbr.rel (0) target = $region61
    $region60: #{dummy_model_forward.1} parent=1 // pred_region
      _
    $region61: #{dummy_model_forward.1} parent=1 // pred_fallthru
      _
    %1564 = vsyncpa [#allocation4], 1

</llo_original>
